<compile_context>
chip_gen: v6e
topology: v6e:2x2x1
jax: 0.10.0
libtpu: 0.0.40
codegen_flags: <defaults>
</compile_context>

<pallas_src>
import jax
import jax.numpy as jnp
from jax.experimental import pallas as pl
from jax.experimental.pallas import tpu as pltpu

CHUNK = 256            # lanes per in-register chunk: one (8, CHUNK) f32 slab = 2 vregs
MAX_TILE_LANES = 4096  # lanes per grid step  -> 8 * 4096 = 32K batch elements / step


def _mlp_kernel(x_ref, a1_ref, c1_ref, a2_ref, c2_ref, a3_ref, c3_ref, o_ref):
    # x_ref: (8, 8, T) VMEM block (feature, sublane, lane); o_ref: (8, T) VMEM.
    # a*/c* are SMEM-resident folded weights:
    #   hidden layers: u = tanh(A @ prev + c)
    #   output layer : y = 0.5 * tanh(A @ u2 + c) + 0.5
    # which equals sigmoid(W @ h + b) of the original network exactly.
    tile_l = o_ref.shape[1]
    n_chunks = tile_l // CHUNK

    def affine(inp, a_ref, c_ref, j, n_in):
        acc = inp[0] * a_ref[j, 0]
        for k in range(1, n_in):
            acc = acc + inp[k] * a_ref[j, k]
        return acc + c_ref[j]

    for c in range(n_chunks):                      # static unroll; no carried state
        sl = pl.ds(c * CHUNK, CHUNK)
        # Eight dense (8, CHUNK) slabs: batch on sublanes+lanes, one slab per feature.
        rows = [x_ref[k, :, sl] for k in range(8)]
        h1 = [jnp.tanh(affine(rows, a1_ref, c1_ref, j, 8)) for j in range(6)]
        h2 = [jnp.tanh(affine(h1, a2_ref, c2_ref, j, 6)) for j in range(4)]
        y = 0.5 * jnp.tanh(affine(h2, a3_ref, c3_ref, 0, 4)) + 0.5
        o_ref[:, sl] = y                           # full, lane-dense unmasked store


def _fold_params(params):
    """Fold the sigmoid affine constants into the tiny weight matrices."""
    w1, b1, w2, b2, w3, b3 = params
    a1 = 0.5 * w1
    c1 = 0.5 * b1
    a2 = 0.25 * w2
    c2 = 0.5 * b2 + 0.25 * jnp.sum(w2, axis=1)
    a3 = 0.25 * w3
    c3 = 0.5 * b3 + 0.25 * jnp.sum(w3, axis=1)
    return a1, c1, a2, c2, a3, c3


@jax.jit
def mlp_forward(x, params):
    """x: (N, 8) float32; returns (N, 1) float32 (same semantics as the torch Model)."""
    n = x.shape[0]
    lanes = pl.cdiv(n, 8)                          # batch elements per sublane row
    lanes = pl.cdiv(lanes, CHUNK) * CHUNK          # lane axis multiple of CHUNK
    tile_l = min(MAX_TILE_LANES, lanes)
    if lanes // tile_l < 2 and lanes >= 2 * CHUNK:
        # keep >= 2 grid steps so v7x's second TensorCore gets work
        tile_l = pl.cdiv(lanes // 2, CHUNK) * CHUNK
    n_lanes_pad = pl.cdiv(lanes, tile_l) * tile_l
    n_pad = 8 * n_lanes_pad

    # Layout plumbing (one fused XLA copy under jit): batch onto sublanes+lanes.
    # TODO(synk): accept a feature-major (8, N) input upstream to drop this transpose copy.
    x_t = jnp.pad(x.T.astype(jnp.float32), ((0, 0), (0, n_pad - n)))   # (8, n_pad)
    x_r = x_t.reshape(8, 8, n_lanes_pad)                               # free reshape

    a1, c1, a2, c2, a3, c3 = _fold_params(params)

    smem = pl.BlockSpec(memory_space=pltpu.MemorySpace.SMEM)
    out = pl.pallas_call(
        _mlp_kernel,
        out_shape=jax.ShapeDtypeStruct((8, n_lanes_pad), jnp.float32),
        grid=(n_lanes_pad // tile_l,),
        in_specs=[
            pl.BlockSpec((8, 8, tile_l), lambda i: (0, 0, i)),  # x tiled along lanes
            smem, smem,                                          # a1 (6,8), c1 (6,)
            smem, smem,                                          # a2 (4,6), c2 (4,)
            smem, smem,                                          # a3 (1,4), c3 (1,)
        ],
        out_specs=pl.BlockSpec((8, tile_l), lambda i: (0, i)),
        compiler_params=pltpu.CompilerParams(
            dimension_semantics=("parallel",),                   # megacore split on v7x
        ),
    )(x_r, a1, c1, a2, c2, a3, c3)

    return out.reshape(-1)[:n][:, None]            # back to (N, 1)


def init_params(key):
    # Mimic torch.nn.Linear init: U(-1/sqrt(in), 1/sqrt(in)); weights are (out, in).
    ks = jax.random.split(key, 6)

    def linear(kw, kb, fan_in, fan_out):
        bound = 1.0 / jnp.sqrt(float(fan_in))
        w = jax.random.uniform(kw, (fan_out, fan_in), jnp.float32, -bound, bound)
        b = jax.random.uniform(kb, (fan_out,), jnp.float32, -bound, bound)
        return w, b

    w1, b1 = linear(ks[0], ks[1], 8, 6)
    w2, b2 = linear(ks[2], ks[3], 6, 4)
    w3, b3 = linear(ks[4], ks[5], 4, 1)
    return (w1, b1, w2, b2, w3, b3)


def reference_forward(x, params):
    w1, b1, w2, b2, w3, b3 = params
    h = jax.nn.sigmoid(x @ w1.T + b1)
    h = jax.nn.sigmoid(h @ w2.T + b2)
    return jax.nn.sigmoid(h @ w3.T + b3)


if __name__ == "__main__":
    key = jax.random.PRNGKey(0)
    kx, kp = jax.random.split(key)
    batch = 4100  # non-multiple size: exercises padding, 2 grid steps, 2 inner chunks
    x = jax.random.normal(kx, (batch, 8), dtype=jnp.float32)
    params = init_params(kp)

    out = jax.block_until_ready(mlp_forward(x, params))
    ref = reference_forward(x, params)

    assert out.shape == (batch, 1), out.shape
    assert jnp.allclose(out, ref, atol=2e-5, rtol=1e-5), float(jnp.max(jnp.abs(out - ref)))
    print("KERNEL_OK")
</pallas_src>

<mosaic_0001>
module attributes {stable_mosaic.version = 11 : i64} {
  func.func @_mlp_kernel(%arg0: i32, %arg1: memref<8x8x512xf32, #tpu.memory_space<vmem>>, %arg2: memref<6x8xf32, #tpu.memory_space<smem>>, %arg3: memref<6xf32, #tpu.memory_space<smem>>, %arg4: memref<4x6xf32, #tpu.memory_space<smem>>, %arg5: memref<4xf32, #tpu.memory_space<smem>>, %arg6: memref<1x4xf32, #tpu.memory_space<smem>>, %arg7: memref<1xf32, #tpu.memory_space<smem>>, %arg8: memref<8x512xf32, #tpu.memory_space<vmem>>) attributes {dimension_semantics = [#tpu.dimension_semantics<parallel>], iteration_bounds = array<i64: 2>, scalar_prefetch = 0 : i64, scratch_operands = 0 : i64, tpu.core_type = #tpu.core_type<tc>, window_params = [{transform_indices = @transform_0, window_bounds = array<i64: 8, 8, 512>}, {transform_indices = @transform_1, window_bounds = array<i64: 6, 8>}, {transform_indices = @transform_2, window_bounds = array<i64: 6>}, {transform_indices = @transform_3, window_bounds = array<i64: 4, 6>}, {transform_indices = @transform_4, window_bounds = array<i64: 4>}, {transform_indices = @transform_5, window_bounds = array<i64: 1, 4>}, {transform_indices = @transform_6, window_bounds = array<i64: 1>}, {transform_indices = @transform_7, window_bounds = array<i64: 8, 512>}]} {
    %c0 = arith.constant 0 : index
    %c0_0 = arith.constant 0 : index
    %c0_1 = arith.constant 0 : index
    %0 = vector.load %arg1[%c0, %c0_0, %c0_1] : memref<8x8x512xf32, #tpu.memory_space<vmem>>, vector<1x8x256xf32>
    %1 = vector.shape_cast %0 : vector<1x8x256xf32> to vector<8x256xf32>
    %c1 = arith.constant 1 : index
    %c0_2 = arith.constant 0 : index
    %c0_3 = arith.constant 0 : index
    %2 = vector.load %arg1[%c1, %c0_2, %c0_3] : memref<8x8x512xf32, #tpu.memory_space<vmem>>, vector<1x8x256xf32>
    %3 = vector.shape_cast %2 : vector<1x8x256xf32> to vector<8x256xf32>
    %c2 = arith.constant 2 : index
    %c0_4 = arith.constant 0 : index
    %c0_5 = arith.constant 0 : index
    %4 = vector.load %arg1[%c2, %c0_4, %c0_5] : memref<8x8x512xf32, #tpu.memory_space<vmem>>, vector<1x8x256xf32>
    %5 = vector.shape_cast %4 : vector<1x8x256xf32> to vector<8x256xf32>
    %c3 = arith.constant 3 : index
    %c0_6 = arith.constant 0 : index
    %c0_7 = arith.constant 0 : index
    %6 = vector.load %arg1[%c3, %c0_6, %c0_7] : memref<8x8x512xf32, #tpu.memory_space<vmem>>, vector<1x8x256xf32>
    %7 = vector.shape_cast %6 : vector<1x8x256xf32> to vector<8x256xf32>
    %c4 = arith.constant 4 : index
    %c0_8 = arith.constant 0 : index
    %c0_9 = arith.constant 0 : index
    %8 = vector.load %arg1[%c4, %c0_8, %c0_9] : memref<8x8x512xf32, #tpu.memory_space<vmem>>, vector<1x8x256xf32>
    %9 = vector.shape_cast %8 : vector<1x8x256xf32> to vector<8x256xf32>
    %c5 = arith.constant 5 : index
    %c0_10 = arith.constant 0 : index
    %c0_11 = arith.constant 0 : index
    %10 = vector.load %arg1[%c5, %c0_10, %c0_11] : memref<8x8x512xf32, #tpu.memory_space<vmem>>, vector<1x8x256xf32>
    %11 = vector.shape_cast %10 : vector<1x8x256xf32> to vector<8x256xf32>
    %c6 = arith.constant 6 : index
    %c0_12 = arith.constant 0 : index
    %c0_13 = arith.constant 0 : index
    %12 = vector.load %arg1[%c6, %c0_12, %c0_13] : memref<8x8x512xf32, #tpu.memory_space<vmem>>, vector<1x8x256xf32>
    %13 = vector.shape_cast %12 : vector<1x8x256xf32> to vector<8x256xf32>
    %c7 = arith.constant 7 : index
    %c0_14 = arith.constant 0 : index
    %c0_15 = arith.constant 0 : index
    %14 = vector.load %arg1[%c7, %c0_14, %c0_15] : memref<8x8x512xf32, #tpu.memory_space<vmem>>, vector<1x8x256xf32>
    %15 = vector.shape_cast %14 : vector<1x8x256xf32> to vector<8x256xf32>
    %c0_16 = arith.constant 0 : index
    %c0_17 = arith.constant 0 : index
    %16 = memref.load %arg2[%c0_16, %c0_17] : memref<6x8xf32, #tpu.memory_space<smem>>
    %17 = vector.broadcast %16 : f32 to vector<8x256xf32>
    %18 = arith.mulf %1, %17 : vector<8x256xf32>
    %c0_18 = arith.constant 0 : index
    %c1_19 = arith.constant 1 : index
    %19 = memref.load %arg2[%c0_18, %c1_19] : memref<6x8xf32, #tpu.memory_space<smem>>
    %20 = vector.broadcast %19 : f32 to vector<8x256xf32>
    %21 = arith.mulf %3, %20 : vector<8x256xf32>
    %22 = arith.addf %18, %21 : vector<8x256xf32>
    %c0_20 = arith.constant 0 : index
    %c2_21 = arith.constant 2 : index
    %23 = memref.load %arg2[%c0_20, %c2_21] : memref<6x8xf32, #tpu.memory_space<smem>>
    %24 = vector.broadcast %23 : f32 to vector<8x256xf32>
    %25 = arith.mulf %5, %24 : vector<8x256xf32>
    %26 = arith.addf %22, %25 : vector<8x256xf32>
    %c0_22 = arith.constant 0 : index
    %c3_23 = arith.constant 3 : index
    %27 = memref.load %arg2[%c0_22, %c3_23] : memref<6x8xf32, #tpu.memory_space<smem>>
    %28 = vector.broadcast %27 : f32 to vector<8x256xf32>
    %29 = arith.mulf %7, %28 : vector<8x256xf32>
    %30 = arith.addf %26, %29 : vector<8x256xf32>
    %c0_24 = arith.constant 0 : index
    %c4_25 = arith.constant 4 : index
    %31 = memref.load %arg2[%c0_24, %c4_25] : memref<6x8xf32, #tpu.memory_space<smem>>
    %32 = vector.broadcast %31 : f32 to vector<8x256xf32>
    %33 = arith.mulf %9, %32 : vector<8x256xf32>
    %34 = arith.addf %30, %33 : vector<8x256xf32>
    %c0_26 = arith.constant 0 : index
    %c5_27 = arith.constant 5 : index
    %35 = memref.load %arg2[%c0_26, %c5_27] : memref<6x8xf32, #tpu.memory_space<smem>>
    %36 = vector.broadcast %35 : f32 to vector<8x256xf32>
    %37 = arith.mulf %11, %36 : vector<8x256xf32>
    %38 = arith.addf %34, %37 : vector<8x256xf32>
    %c0_28 = arith.constant 0 : index
    %c6_29 = arith.constant 6 : index
    %39 = memref.load %arg2[%c0_28, %c6_29] : memref<6x8xf32, #tpu.memory_space<smem>>
    %40 = vector.broadcast %39 : f32 to vector<8x256xf32>
    %41 = arith.mulf %13, %40 : vector<8x256xf32>
    %42 = arith.addf %38, %41 : vector<8x256xf32>
    %c0_30 = arith.constant 0 : index
    %c7_31 = arith.constant 7 : index
    %43 = memref.load %arg2[%c0_30, %c7_31] : memref<6x8xf32, #tpu.memory_space<smem>>
    %44 = vector.broadcast %43 : f32 to vector<8x256xf32>
    %45 = arith.mulf %15, %44 : vector<8x256xf32>
    %46 = arith.addf %42, %45 : vector<8x256xf32>
    %c0_32 = arith.constant 0 : index
    %47 = memref.load %arg3[%c0_32] : memref<6xf32, #tpu.memory_space<smem>>
    %48 = vector.broadcast %47 : f32 to vector<8x256xf32>
    %49 = arith.addf %46, %48 : vector<8x256xf32>
    %50 = math.tanh %49 : vector<8x256xf32>
    %c1_33 = arith.constant 1 : index
    %c0_34 = arith.constant 0 : index
    %51 = memref.load %arg2[%c1_33, %c0_34] : memref<6x8xf32, #tpu.memory_space<smem>>
    %52 = vector.broadcast %51 : f32 to vector<8x256xf32>
    %53 = arith.mulf %1, %52 : vector<8x256xf32>
    %c1_35 = arith.constant 1 : index
    %c1_36 = arith.constant 1 : index
    %54 = memref.load %arg2[%c1_35, %c1_36] : memref<6x8xf32, #tpu.memory_space<smem>>
    %55 = vector.broadcast %54 : f32 to vector<8x256xf32>
    %56 = arith.mulf %3, %55 : vector<8x256xf32>
    %57 = arith.addf %53, %56 : vector<8x256xf32>
    %c1_37 = arith.constant 1 : index
    %c2_38 = arith.constant 2 : index
    %58 = memref.load %arg2[%c1_37, %c2_38] : memref<6x8xf32, #tpu.memory_space<smem>>
    %59 = vector.broadcast %58 : f32 to vector<8x256xf32>
    %60 = arith.mulf %5, %59 : vector<8x256xf32>
    %61 = arith.addf %57, %60 : vector<8x256xf32>
    %c1_39 = arith.constant 1 : index
    %c3_40 = arith.constant 3 : index
    %62 = memref.load %arg2[%c1_39, %c3_40] : memref<6x8xf32, #tpu.memory_space<smem>>
    %63 = vector.broadcast %62 : f32 to vector<8x256xf32>
    %64 = arith.mulf %7, %63 : vector<8x256xf32>
    %65 = arith.addf %61, %64 : vector<8x256xf32>
    %c1_41 = arith.constant 1 : index
    %c4_42 = arith.constant 4 : index
    %66 = memref.load %arg2[%c1_41, %c4_42] : memref<6x8xf32, #tpu.memory_space<smem>>
    %67 = vector.broadcast %66 : f32 to vector<8x256xf32>
    %68 = arith.mulf %9, %67 : vector<8x256xf32>
    %69 = arith.addf %65, %68 : vector<8x256xf32>
    %c1_43 = arith.constant 1 : index
    %c5_44 = arith.constant 5 : index
    %70 = memref.load %arg2[%c1_43, %c5_44] : memref<6x8xf32, #tpu.memory_space<smem>>
    %71 = vector.broadcast %70 : f32 to vector<8x256xf32>
    %72 = arith.mulf %11, %71 : vector<8x256xf32>
    %73 = arith.addf %69, %72 : vector<8x256xf32>
    %c1_45 = arith.constant 1 : index
    %c6_46 = arith.constant 6 : index
    %74 = memref.load %arg2[%c1_45, %c6_46] : memref<6x8xf32, #tpu.memory_space<smem>>
    %75 = vector.broadcast %74 : f32 to vector<8x256xf32>
    %76 = arith.mulf %13, %75 : vector<8x256xf32>
    %77 = arith.addf %73, %76 : vector<8x256xf32>
    %c1_47 = arith.constant 1 : index
    %c7_48 = arith.constant 7 : index
    %78 = memref.load %arg2[%c1_47, %c7_48] : memref<6x8xf32, #tpu.memory_space<smem>>
    %79 = vector.broadcast %78 : f32 to vector<8x256xf32>
    %80 = arith.mulf %15, %79 : vector<8x256xf32>
    %81 = arith.addf %77, %80 : vector<8x256xf32>
    %c1_49 = arith.constant 1 : index
    %82 = memref.load %arg3[%c1_49] : memref<6xf32, #tpu.memory_space<smem>>
    %83 = vector.broadcast %82 : f32 to vector<8x256xf32>
    %84 = arith.addf %81, %83 : vector<8x256xf32>
    %85 = math.tanh %84 : vector<8x256xf32>
    %c2_50 = arith.constant 2 : index
    %c0_51 = arith.constant 0 : index
    %86 = memref.load %arg2[%c2_50, %c0_51] : memref<6x8xf32, #tpu.memory_space<smem>>
    %87 = vector.broadcast %86 : f32 to vector<8x256xf32>
    %88 = arith.mulf %1, %87 : vector<8x256xf32>
    %c2_52 = arith.constant 2 : index
    %c1_53 = arith.constant 1 : index
    %89 = memref.load %arg2[%c2_52, %c1_53] : memref<6x8xf32, #tpu.memory_space<smem>>
    %90 = vector.broadcast %89 : f32 to vector<8x256xf32>
    %91 = arith.mulf %3, %90 : vector<8x256xf32>
    %92 = arith.addf %88, %91 : vector<8x256xf32>
    %c2_54 = arith.constant 2 : index
    %c2_55 = arith.constant 2 : index
    %93 = memref.load %arg2[%c2_54, %c2_55] : memref<6x8xf32, #tpu.memory_space<smem>>
    %94 = vector.broadcast %93 : f32 to vector<8x256xf32>
    %95 = arith.mulf %5, %94 : vector<8x256xf32>
    %96 = arith.addf %92, %95 : vector<8x256xf32>
    %c2_56 = arith.constant 2 : index
    %c3_57 = arith.constant 3 : index
    %97 = memref.load %arg2[%c2_56, %c3_57] : memref<6x8xf32, #tpu.memory_space<smem>>
    %98 = vector.broadcast %97 : f32 to vector<8x256xf32>
    %99 = arith.mulf %7, %98 : vector<8x256xf32>
    %100 = arith.addf %96, %99 : vector<8x256xf32>
    %c2_58 = arith.constant 2 : index
    %c4_59 = arith.constant 4 : index
    %101 = memref.load %arg2[%c2_58, %c4_59] : memref<6x8xf32, #tpu.memory_space<smem>>
    %102 = vector.broadcast %101 : f32 to vector<8x256xf32>
    %103 = arith.mulf %9, %102 : vector<8x256xf32>
    %104 = arith.addf %100, %103 : vector<8x256xf32>
    %c2_60 = arith.constant 2 : index
    %c5_61 = arith.constant 5 : index
    %105 = memref.load %arg2[%c2_60, %c5_61] : memref<6x8xf32, #tpu.memory_space<smem>>
    %106 = vector.broadcast %105 : f32 to vector<8x256xf32>
    %107 = arith.mulf %11, %106 : vector<8x256xf32>
    %108 = arith.addf %104, %107 : vector<8x256xf32>
    %c2_62 = arith.constant 2 : index
    %c6_63 = arith.constant 6 : index
    %109 = memref.load %arg2[%c2_62, %c6_63] : memref<6x8xf32, #tpu.memory_space<smem>>
    %110 = vector.broadcast %109 : f32 to vector<8x256xf32>
    %111 = arith.mulf %13, %110 : vector<8x256xf32>
    %112 = arith.addf %108, %111 : vector<8x256xf32>
    %c2_64 = arith.constant 2 : index
    %c7_65 = arith.constant 7 : index
    %113 = memref.load %arg2[%c2_64, %c7_65] : memref<6x8xf32, #tpu.memory_space<smem>>
    %114 = vector.broadcast %113 : f32 to vector<8x256xf32>
    %115 = arith.mulf %15, %114 : vector<8x256xf32>
    %116 = arith.addf %112, %115 : vector<8x256xf32>
    %c2_66 = arith.constant 2 : index
    %117 = memref.load %arg3[%c2_66] : memref<6xf32, #tpu.memory_space<smem>>
    %118 = vector.broadcast %117 : f32 to vector<8x256xf32>
    %119 = arith.addf %116, %118 : vector<8x256xf32>
    %120 = math.tanh %119 : vector<8x256xf32>
    %c3_67 = arith.constant 3 : index
    %c0_68 = arith.constant 0 : index
    %121 = memref.load %arg2[%c3_67, %c0_68] : memref<6x8xf32, #tpu.memory_space<smem>>
    %122 = vector.broadcast %121 : f32 to vector<8x256xf32>
    %123 = arith.mulf %1, %122 : vector<8x256xf32>
    %c3_69 = arith.constant 3 : index
    %c1_70 = arith.constant 1 : index
    %124 = memref.load %arg2[%c3_69, %c1_70] : memref<6x8xf32, #tpu.memory_space<smem>>
    %125 = vector.broadcast %124 : f32 to vector<8x256xf32>
    %126 = arith.mulf %3, %125 : vector<8x256xf32>
    %127 = arith.addf %123, %126 : vector<8x256xf32>
    %c3_71 = arith.constant 3 : index
    %c2_72 = arith.constant 2 : index
    %128 = memref.load %arg2[%c3_71, %c2_72] : memref<6x8xf32, #tpu.memory_space<smem>>
    %129 = vector.broadcast %128 : f32 to vector<8x256xf32>
    %130 = arith.mulf %5, %129 : vector<8x256xf32>
    %131 = arith.addf %127, %130 : vector<8x256xf32>
    %c3_73 = arith.constant 3 : index
    %c3_74 = arith.constant 3 : index
    %132 = memref.load %arg2[%c3_73, %c3_74] : memref<6x8xf32, #tpu.memory_space<smem>>
    %133 = vector.broadcast %132 : f32 to vector<8x256xf32>
    %134 = arith.mulf %7, %133 : vector<8x256xf32>
    %135 = arith.addf %131, %134 : vector<8x256xf32>
    %c3_75 = arith.constant 3 : index
    %c4_76 = arith.constant 4 : index
    %136 = memref.load %arg2[%c3_75, %c4_76] : memref<6x8xf32, #tpu.memory_space<smem>>
    %137 = vector.broadcast %136 : f32 to vector<8x256xf32>
    %138 = arith.mulf %9, %137 : vector<8x256xf32>
    %139 = arith.addf %135, %138 : vector<8x256xf32>
    %c3_77 = arith.constant 3 : index
    %c5_78 = arith.constant 5 : index
    %140 = memref.load %arg2[%c3_77, %c5_78] : memref<6x8xf32, #tpu.memory_space<smem>>
    %141 = vector.broadcast %140 : f32 to vector<8x256xf32>
    %142 = arith.mulf %11, %141 : vector<8x256xf32>
    %143 = arith.addf %139, %142 : vector<8x256xf32>
    %c3_79 = arith.constant 3 : index
    %c6_80 = arith.constant 6 : index
    %144 = memref.load %arg2[%c3_79, %c6_80] : memref<6x8xf32, #tpu.memory_space<smem>>
    %145 = vector.broadcast %144 : f32 to vector<8x256xf32>
    %146 = arith.mulf %13, %145 : vector<8x256xf32>
    %147 = arith.addf %143, %146 : vector<8x256xf32>
    %c3_81 = arith.constant 3 : index
    %c7_82 = arith.constant 7 : index
    %148 = memref.load %arg2[%c3_81, %c7_82] : memref<6x8xf32, #tpu.memory_space<smem>>
    %149 = vector.broadcast %148 : f32 to vector<8x256xf32>
    %150 = arith.mulf %15, %149 : vector<8x256xf32>
    %151 = arith.addf %147, %150 : vector<8x256xf32>
    %c3_83 = arith.constant 3 : index
    %152 = memref.load %arg3[%c3_83] : memref<6xf32, #tpu.memory_space<smem>>
    %153 = vector.broadcast %152 : f32 to vector<8x256xf32>
    %154 = arith.addf %151, %153 : vector<8x256xf32>
    %155 = math.tanh %154 : vector<8x256xf32>
    %c4_84 = arith.constant 4 : index
    %c0_85 = arith.constant 0 : index
    %156 = memref.load %arg2[%c4_84, %c0_85] : memref<6x8xf32, #tpu.memory_space<smem>>
    %157 = vector.broadcast %156 : f32 to vector<8x256xf32>
    %158 = arith.mulf %1, %157 : vector<8x256xf32>
    %c4_86 = arith.constant 4 : index
    %c1_87 = arith.constant 1 : index
    %159 = memref.load %arg2[%c4_86, %c1_87] : memref<6x8xf32, #tpu.memory_space<smem>>
    %160 = vector.broadcast %159 : f32 to vector<8x256xf32>
    %161 = arith.mulf %3, %160 : vector<8x256xf32>
    %162 = arith.addf %158, %161 : vector<8x256xf32>
    %c4_88 = arith.constant 4 : index
    %c2_89 = arith.constant 2 : index
    %163 = memref.load %arg2[%c4_88, %c2_89] : memref<6x8xf32, #tpu.memory_space<smem>>
    %164 = vector.broadcast %163 : f32 to vector<8x256xf32>
    %165 = arith.mulf %5, %164 : vector<8x256xf32>
    %166 = arith.addf %162, %165 : vector<8x256xf32>
    %c4_90 = arith.constant 4 : index
    %c3_91 = arith.constant 3 : index
    %167 = memref.load %arg2[%c4_90, %c3_91] : memref<6x8xf32, #tpu.memory_space<smem>>
    %168 = vector.broadcast %167 : f32 to vector<8x256xf32>
    %169 = arith.mulf %7, %168 : vector<8x256xf32>
    %170 = arith.addf %166, %169 : vector<8x256xf32>
    %c4_92 = arith.constant 4 : index
    %c4_93 = arith.constant 4 : index
    %171 = memref.load %arg2[%c4_92, %c4_93] : memref<6x8xf32, #tpu.memory_space<smem>>
    %172 = vector.broadcast %171 : f32 to vector<8x256xf32>
    %173 = arith.mulf %9, %172 : vector<8x256xf32>
    %174 = arith.addf %170, %173 : vector<8x256xf32>
    %c4_94 = arith.constant 4 : index
    %c5_95 = arith.constant 5 : index
    %175 = memref.load %arg2[%c4_94, %c5_95] : memref<6x8xf32, #tpu.memory_space<smem>>
    %176 = vector.broadcast %175 : f32 to vector<8x256xf32>
    %177 = arith.mulf %11, %176 : vector<8x256xf32>
    %178 = arith.addf %174, %177 : vector<8x256xf32>
    %c4_96 = arith.constant 4 : index
    %c6_97 = arith.constant 6 : index
    %179 = memref.load %arg2[%c4_96, %c6_97] : memref<6x8xf32, #tpu.memory_space<smem>>
    %180 = vector.broadcast %179 : f32 to vector<8x256xf32>
    %181 = arith.mulf %13, %180 : vector<8x256xf32>
    %182 = arith.addf %178, %181 : vector<8x256xf32>
    %c4_98 = arith.constant 4 : index
    %c7_99 = arith.constant 7 : index
    %183 = memref.load %arg2[%c4_98, %c7_99] : memref<6x8xf32, #tpu.memory_space<smem>>
    %184 = vector.broadcast %183 : f32 to vector<8x256xf32>
    %185 = arith.mulf %15, %184 : vector<8x256xf32>
    %186 = arith.addf %182, %185 : vector<8x256xf32>
    %c4_100 = arith.constant 4 : index
    %187 = memref.load %arg3[%c4_100] : memref<6xf32, #tpu.memory_space<smem>>
    %188 = vector.broadcast %187 : f32 to vector<8x256xf32>
    %189 = arith.addf %186, %188 : vector<8x256xf32>
    %190 = math.tanh %189 : vector<8x256xf32>
    %c5_101 = arith.constant 5 : index
    %c0_102 = arith.constant 0 : index
    %191 = memref.load %arg2[%c5_101, %c0_102] : memref<6x8xf32, #tpu.memory_space<smem>>
    %192 = vector.broadcast %191 : f32 to vector<8x256xf32>
    %193 = arith.mulf %1, %192 : vector<8x256xf32>
    %c5_103 = arith.constant 5 : index
    %c1_104 = arith.constant 1 : index
    %194 = memref.load %arg2[%c5_103, %c1_104] : memref<6x8xf32, #tpu.memory_space<smem>>
    %195 = vector.broadcast %194 : f32 to vector<8x256xf32>
    %196 = arith.mulf %3, %195 : vector<8x256xf32>
    %197 = arith.addf %193, %196 : vector<8x256xf32>
    %c5_105 = arith.constant 5 : index
    %c2_106 = arith.constant 2 : index
    %198 = memref.load %arg2[%c5_105, %c2_106] : memref<6x8xf32, #tpu.memory_space<smem>>
    %199 = vector.broadcast %198 : f32 to vector<8x256xf32>
    %200 = arith.mulf %5, %199 : vector<8x256xf32>
    %201 = arith.addf %197, %200 : vector<8x256xf32>
    %c5_107 = arith.constant 5 : index
    %c3_108 = arith.constant 3 : index
    %202 = memref.load %arg2[%c5_107, %c3_108] : memref<6x8xf32, #tpu.memory_space<smem>>
    %203 = vector.broadcast %202 : f32 to vector<8x256xf32>
    %204 = arith.mulf %7, %203 : vector<8x256xf32>
    %205 = arith.addf %201, %204 : vector<8x256xf32>
    %c5_109 = arith.constant 5 : index
    %c4_110 = arith.constant 4 : index
    %206 = memref.load %arg2[%c5_109, %c4_110] : memref<6x8xf32, #tpu.memory_space<smem>>
    %207 = vector.broadcast %206 : f32 to vector<8x256xf32>
    %208 = arith.mulf %9, %207 : vector<8x256xf32>
    %209 = arith.addf %205, %208 : vector<8x256xf32>
    %c5_111 = arith.constant 5 : index
    %c5_112 = arith.constant 5 : index
    %210 = memref.load %arg2[%c5_111, %c5_112] : memref<6x8xf32, #tpu.memory_space<smem>>
    %211 = vector.broadcast %210 : f32 to vector<8x256xf32>
    %212 = arith.mulf %11, %211 : vector<8x256xf32>
    %213 = arith.addf %209, %212 : vector<8x256xf32>
    %c5_113 = arith.constant 5 : index
    %c6_114 = arith.constant 6 : index
    %214 = memref.load %arg2[%c5_113, %c6_114] : memref<6x8xf32, #tpu.memory_space<smem>>
    %215 = vector.broadcast %214 : f32 to vector<8x256xf32>
    %216 = arith.mulf %13, %215 : vector<8x256xf32>
    %217 = arith.addf %213, %216 : vector<8x256xf32>
    %c5_115 = arith.constant 5 : index
    %c7_116 = arith.constant 7 : index
    %218 = memref.load %arg2[%c5_115, %c7_116] : memref<6x8xf32, #tpu.memory_space<smem>>
    %219 = vector.broadcast %218 : f32 to vector<8x256xf32>
    %220 = arith.mulf %15, %219 : vector<8x256xf32>
    %221 = arith.addf %217, %220 : vector<8x256xf32>
    %c5_117 = arith.constant 5 : index
    %222 = memref.load %arg3[%c5_117] : memref<6xf32, #tpu.memory_space<smem>>
    %223 = vector.broadcast %222 : f32 to vector<8x256xf32>
    %224 = arith.addf %221, %223 : vector<8x256xf32>
    %225 = math.tanh %224 : vector<8x256xf32>
    %c0_118 = arith.constant 0 : index
    %c0_119 = arith.constant 0 : index
    %226 = memref.load %arg4[%c0_118, %c0_119] : memref<4x6xf32, #tpu.memory_space<smem>>
    %227 = vector.broadcast %226 : f32 to vector<8x256xf32>
    %228 = arith.mulf %50, %227 : vector<8x256xf32>
    %c0_120 = arith.constant 0 : index
    %c1_121 = arith.constant 1 : index
    %229 = memref.load %arg4[%c0_120, %c1_121] : memref<4x6xf32, #tpu.memory_space<smem>>
    %230 = vector.broadcast %229 : f32 to vector<8x256xf32>
    %231 = arith.mulf %85, %230 : vector<8x256xf32>
    %232 = arith.addf %228, %231 : vector<8x256xf32>
    %c0_122 = arith.constant 0 : index
    %c2_123 = arith.constant 2 : index
    %233 = memref.load %arg4[%c0_122, %c2_123] : memref<4x6xf32, #tpu.memory_space<smem>>
    %234 = vector.broadcast %233 : f32 to vector<8x256xf32>
    %235 = arith.mulf %120, %234 : vector<8x256xf32>
    %236 = arith.addf %232, %235 : vector<8x256xf32>
    %c0_124 = arith.constant 0 : index
    %c3_125 = arith.constant 3 : index
    %237 = memref.load %arg4[%c0_124, %c3_125] : memref<4x6xf32, #tpu.memory_space<smem>>
    %238 = vector.broadcast %237 : f32 to vector<8x256xf32>
    %239 = arith.mulf %155, %238 : vector<8x256xf32>
    %240 = arith.addf %236, %239 : vector<8x256xf32>
    %c0_126 = arith.constant 0 : index
    %c4_127 = arith.constant 4 : index
    %241 = memref.load %arg4[%c0_126, %c4_127] : memref<4x6xf32, #tpu.memory_space<smem>>
    %242 = vector.broadcast %241 : f32 to vector<8x256xf32>
    %243 = arith.mulf %190, %242 : vector<8x256xf32>
    %244 = arith.addf %240, %243 : vector<8x256xf32>
    %c0_128 = arith.constant 0 : index
    %c5_129 = arith.constant 5 : index
    %245 = memref.load %arg4[%c0_128, %c5_129] : memref<4x6xf32, #tpu.memory_space<smem>>
    %246 = vector.broadcast %245 : f32 to vector<8x256xf32>
    %247 = arith.mulf %225, %246 : vector<8x256xf32>
    %248 = arith.addf %244, %247 : vector<8x256xf32>
    %c0_130 = arith.constant 0 : index
    %249 = memref.load %arg5[%c0_130] : memref<4xf32, #tpu.memory_space<smem>>
    %250 = vector.broadcast %249 : f32 to vector<8x256xf32>
    %251 = arith.addf %248, %250 : vector<8x256xf32>
    %252 = math.tanh %251 : vector<8x256xf32>
    %c1_131 = arith.constant 1 : index
    %c0_132 = arith.constant 0 : index
    %253 = memref.load %arg4[%c1_131, %c0_132] : memref<4x6xf32, #tpu.memory_space<smem>>
    %254 = vector.broadcast %253 : f32 to vector<8x256xf32>
    %255 = arith.mulf %50, %254 : vector<8x256xf32>
    %c1_133 = arith.constant 1 : index
    %c1_134 = arith.constant 1 : index
    %256 = memref.load %arg4[%c1_133, %c1_134] : memref<4x6xf32, #tpu.memory_space<smem>>
    %257 = vector.broadcast %256 : f32 to vector<8x256xf32>
    %258 = arith.mulf %85, %257 : vector<8x256xf32>
    %259 = arith.addf %255, %258 : vector<8x256xf32>
    %c1_135 = arith.constant 1 : index
    %c2_136 = arith.constant 2 : index
    %260 = memref.load %arg4[%c1_135, %c2_136] : memref<4x6xf32, #tpu.memory_space<smem>>
    %261 = vector.broadcast %260 : f32 to vector<8x256xf32>
    %262 = arith.mulf %120, %261 : vector<8x256xf32>
    %263 = arith.addf %259, %262 : vector<8x256xf32>
    %c1_137 = arith.constant 1 : index
    %c3_138 = arith.constant 3 : index
    %264 = memref.load %arg4[%c1_137, %c3_138] : memref<4x6xf32, #tpu.memory_space<smem>>
    %265 = vector.broadcast %264 : f32 to vector<8x256xf32>
    %266 = arith.mulf %155, %265 : vector<8x256xf32>
    %267 = arith.addf %263, %266 : vector<8x256xf32>
    %c1_139 = arith.constant 1 : index
    %c4_140 = arith.constant 4 : index
    %268 = memref.load %arg4[%c1_139, %c4_140] : memref<4x6xf32, #tpu.memory_space<smem>>
    %269 = vector.broadcast %268 : f32 to vector<8x256xf32>
    %270 = arith.mulf %190, %269 : vector<8x256xf32>
    %271 = arith.addf %267, %270 : vector<8x256xf32>
    %c1_141 = arith.constant 1 : index
    %c5_142 = arith.constant 5 : index
    %272 = memref.load %arg4[%c1_141, %c5_142] : memref<4x6xf32, #tpu.memory_space<smem>>
    %273 = vector.broadcast %272 : f32 to vector<8x256xf32>
    %274 = arith.mulf %225, %273 : vector<8x256xf32>
    %275 = arith.addf %271, %274 : vector<8x256xf32>
    %c1_143 = arith.constant 1 : index
    %276 = memref.load %arg5[%c1_143] : memref<4xf32, #tpu.memory_space<smem>>
    %277 = vector.broadcast %276 : f32 to vector<8x256xf32>
    %278 = arith.addf %275, %277 : vector<8x256xf32>
    %279 = math.tanh %278 : vector<8x256xf32>
    %c2_144 = arith.constant 2 : index
    %c0_145 = arith.constant 0 : index
    %280 = memref.load %arg4[%c2_144, %c0_145] : memref<4x6xf32, #tpu.memory_space<smem>>
    %281 = vector.broadcast %280 : f32 to vector<8x256xf32>
    %282 = arith.mulf %50, %281 : vector<8x256xf32>
    %c2_146 = arith.constant 2 : index
    %c1_147 = arith.constant 1 : index
    %283 = memref.load %arg4[%c2_146, %c1_147] : memref<4x6xf32, #tpu.memory_space<smem>>
    %284 = vector.broadcast %283 : f32 to vector<8x256xf32>
    %285 = arith.mulf %85, %284 : vector<8x256xf32>
    %286 = arith.addf %282, %285 : vector<8x256xf32>
    %c2_148 = arith.constant 2 : index
    %c2_149 = arith.constant 2 : index
    %287 = memref.load %arg4[%c2_148, %c2_149] : memref<4x6xf32, #tpu.memory_space<smem>>
    %288 = vector.broadcast %287 : f32 to vector<8x256xf32>
    %289 = arith.mulf %120, %288 : vector<8x256xf32>
    %290 = arith.addf %286, %289 : vector<8x256xf32>
    %c2_150 = arith.constant 2 : index
    %c3_151 = arith.constant 3 : index
    %291 = memref.load %arg4[%c2_150, %c3_151] : memref<4x6xf32, #tpu.memory_space<smem>>
    %292 = vector.broadcast %291 : f32 to vector<8x256xf32>
    %293 = arith.mulf %155, %292 : vector<8x256xf32>
    %294 = arith.addf %290, %293 : vector<8x256xf32>
    %c2_152 = arith.constant 2 : index
    %c4_153 = arith.constant 4 : index
    %295 = memref.load %arg4[%c2_152, %c4_153] : memref<4x6xf32, #tpu.memory_space<smem>>
    %296 = vector.broadcast %295 : f32 to vector<8x256xf32>
    %297 = arith.mulf %190, %296 : vector<8x256xf32>
    %298 = arith.addf %294, %297 : vector<8x256xf32>
    %c2_154 = arith.constant 2 : index
    %c5_155 = arith.constant 5 : index
    %299 = memref.load %arg4[%c2_154, %c5_155] : memref<4x6xf32, #tpu.memory_space<smem>>
    %300 = vector.broadcast %299 : f32 to vector<8x256xf32>
    %301 = arith.mulf %225, %300 : vector<8x256xf32>
    %302 = arith.addf %298, %301 : vector<8x256xf32>
    %c2_156 = arith.constant 2 : index
    %303 = memref.load %arg5[%c2_156] : memref<4xf32, #tpu.memory_space<smem>>
    %304 = vector.broadcast %303 : f32 to vector<8x256xf32>
    %305 = arith.addf %302, %304 : vector<8x256xf32>
    %306 = math.tanh %305 : vector<8x256xf32>
    %c3_157 = arith.constant 3 : index
    %c0_158 = arith.constant 0 : index
    %307 = memref.load %arg4[%c3_157, %c0_158] : memref<4x6xf32, #tpu.memory_space<smem>>
    %308 = vector.broadcast %307 : f32 to vector<8x256xf32>
    %309 = arith.mulf %50, %308 : vector<8x256xf32>
    %c3_159 = arith.constant 3 : index
    %c1_160 = arith.constant 1 : index
    %310 = memref.load %arg4[%c3_159, %c1_160] : memref<4x6xf32, #tpu.memory_space<smem>>
    %311 = vector.broadcast %310 : f32 to vector<8x256xf32>
    %312 = arith.mulf %85, %311 : vector<8x256xf32>
    %313 = arith.addf %309, %312 : vector<8x256xf32>
    %c3_161 = arith.constant 3 : index
    %c2_162 = arith.constant 2 : index
    %314 = memref.load %arg4[%c3_161, %c2_162] : memref<4x6xf32, #tpu.memory_space<smem>>
    %315 = vector.broadcast %314 : f32 to vector<8x256xf32>
    %316 = arith.mulf %120, %315 : vector<8x256xf32>
    %317 = arith.addf %313, %316 : vector<8x256xf32>
    %c3_163 = arith.constant 3 : index
    %c3_164 = arith.constant 3 : index
    %318 = memref.load %arg4[%c3_163, %c3_164] : memref<4x6xf32, #tpu.memory_space<smem>>
    %319 = vector.broadcast %318 : f32 to vector<8x256xf32>
    %320 = arith.mulf %155, %319 : vector<8x256xf32>
    %321 = arith.addf %317, %320 : vector<8x256xf32>
    %c3_165 = arith.constant 3 : index
    %c4_166 = arith.constant 4 : index
    %322 = memref.load %arg4[%c3_165, %c4_166] : memref<4x6xf32, #tpu.memory_space<smem>>
    %323 = vector.broadcast %322 : f32 to vector<8x256xf32>
    %324 = arith.mulf %190, %323 : vector<8x256xf32>
    %325 = arith.addf %321, %324 : vector<8x256xf32>
    %c3_167 = arith.constant 3 : index
    %c5_168 = arith.constant 5 : index
    %326 = memref.load %arg4[%c3_167, %c5_168] : memref<4x6xf32, #tpu.memory_space<smem>>
    %327 = vector.broadcast %326 : f32 to vector<8x256xf32>
    %328 = arith.mulf %225, %327 : vector<8x256xf32>
    %329 = arith.addf %325, %328 : vector<8x256xf32>
    %c3_169 = arith.constant 3 : index
    %330 = memref.load %arg5[%c3_169] : memref<4xf32, #tpu.memory_space<smem>>
    %331 = vector.broadcast %330 : f32 to vector<8x256xf32>
    %332 = arith.addf %329, %331 : vector<8x256xf32>
    %333 = math.tanh %332 : vector<8x256xf32>
    %c0_170 = arith.constant 0 : index
    %c0_171 = arith.constant 0 : index
    %334 = memref.load %arg6[%c0_170, %c0_171] : memref<1x4xf32, #tpu.memory_space<smem>>
    %335 = vector.broadcast %334 : f32 to vector<8x256xf32>
    %336 = arith.mulf %252, %335 : vector<8x256xf32>
    %c0_172 = arith.constant 0 : index
    %c1_173 = arith.constant 1 : index
    %337 = memref.load %arg6[%c0_172, %c1_173] : memref<1x4xf32, #tpu.memory_space<smem>>
    %338 = vector.broadcast %337 : f32 to vector<8x256xf32>
    %339 = arith.mulf %279, %338 : vector<8x256xf32>
    %340 = arith.addf %336, %339 : vector<8x256xf32>
    %c0_174 = arith.constant 0 : index
    %c2_175 = arith.constant 2 : index
    %341 = memref.load %arg6[%c0_174, %c2_175] : memref<1x4xf32, #tpu.memory_space<smem>>
    %342 = vector.broadcast %341 : f32 to vector<8x256xf32>
    %343 = arith.mulf %306, %342 : vector<8x256xf32>
    %344 = arith.addf %340, %343 : vector<8x256xf32>
    %c0_176 = arith.constant 0 : index
    %c3_177 = arith.constant 3 : index
    %345 = memref.load %arg6[%c0_176, %c3_177] : memref<1x4xf32, #tpu.memory_space<smem>>
    %346 = vector.broadcast %345 : f32 to vector<8x256xf32>
    %347 = arith.mulf %333, %346 : vector<8x256xf32>
    %348 = arith.addf %344, %347 : vector<8x256xf32>
    %c0_178 = arith.constant 0 : index
    %349 = memref.load %arg7[%c0_178] : memref<1xf32, #tpu.memory_space<smem>>
    %350 = vector.broadcast %349 : f32 to vector<8x256xf32>
    %351 = arith.addf %348, %350 : vector<8x256xf32>
    %352 = math.tanh %351 : vector<8x256xf32>
    %cst = arith.constant 5.000000e-01 : f32
    %353 = vector.broadcast %cst : f32 to vector<8x256xf32>
    %354 = arith.mulf %353, %352 : vector<8x256xf32>
    %cst_179 = arith.constant 5.000000e-01 : f32
    %355 = vector.broadcast %cst_179 : f32 to vector<8x256xf32>
    %356 = arith.addf %354, %355 : vector<8x256xf32>
    %c0_180 = arith.constant 0 : index
    %c0_181 = arith.constant 0 : index
    %357 = vector.load %arg8[%c0_180, %c0_181] : memref<8x512xf32, #tpu.memory_space<vmem>>, vector<8x256xf32>
    tpu.vector_store %arg8[%c0_180, %c0_181], %356 {strides = array<i32>} : memref<8x512xf32, #tpu.memory_space<vmem>>, vector<8x256xf32>,
    %c0_182 = arith.constant 0 : index
    %c0_183 = arith.constant 0 : index
    %c256 = arith.constant 256 : index
    %358 = vector.load %arg1[%c0_182, %c0_183, %c256] : memref<8x8x512xf32, #tpu.memory_space<vmem>>, vector<1x8x256xf32>
    %359 = vector.shape_cast %358 : vector<1x8x256xf32> to vector<8x256xf32>
    %c1_184 = arith.constant 1 : index
    %c0_185 = arith.constant 0 : index
    %c256_186 = arith.constant 256 : index
    %360 = vector.load %arg1[%c1_184, %c0_185, %c256_186] : memref<8x8x512xf32, #tpu.memory_space<vmem>>, vector<1x8x256xf32>
    %361 = vector.shape_cast %360 : vector<1x8x256xf32> to vector<8x256xf32>
    %c2_187 = arith.constant 2 : index
    %c0_188 = arith.constant 0 : index
    %c256_189 = arith.constant 256 : index
    %362 = vector.load %arg1[%c2_187, %c0_188, %c256_189] : memref<8x8x512xf32, #tpu.memory_space<vmem>>, vector<1x8x256xf32>
    %363 = vector.shape_cast %362 : vector<1x8x256xf32> to vector<8x256xf32>
    %c3_190 = arith.constant 3 : index
    %c0_191 = arith.constant 0 : index
    %c256_192 = arith.constant 256 : index
    %364 = vector.load %arg1[%c3_190, %c0_191, %c256_192] : memref<8x8x512xf32, #tpu.memory_space<vmem>>, vector<1x8x256xf32>
    %365 = vector.shape_cast %364 : vector<1x8x256xf32> to vector<8x256xf32>
    %c4_193 = arith.constant 4 : index
    %c0_194 = arith.constant 0 : index
    %c256_195 = arith.constant 256 : index
    %366 = vector.load %arg1[%c4_193, %c0_194, %c256_195] : memref<8x8x512xf32, #tpu.memory_space<vmem>>, vector<1x8x256xf32>
    %367 = vector.shape_cast %366 : vector<1x8x256xf32> to vector<8x256xf32>
    %c5_196 = arith.constant 5 : index
    %c0_197 = arith.constant 0 : index
    %c256_198 = arith.constant 256 : index
    %368 = vector.load %arg1[%c5_196, %c0_197, %c256_198] : memref<8x8x512xf32, #tpu.memory_space<vmem>>, vector<1x8x256xf32>
    %369 = vector.shape_cast %368 : vector<1x8x256xf32> to vector<8x256xf32>
    %c6_199 = arith.constant 6 : index
    %c0_200 = arith.constant 0 : index
    %c256_201 = arith.constant 256 : index
    %370 = vector.load %arg1[%c6_199, %c0_200, %c256_201] : memref<8x8x512xf32, #tpu.memory_space<vmem>>, vector<1x8x256xf32>
    %371 = vector.shape_cast %370 : vector<1x8x256xf32> to vector<8x256xf32>
    %c7_202 = arith.constant 7 : index
    %c0_203 = arith.constant 0 : index
    %c256_204 = arith.constant 256 : index
    %372 = vector.load %arg1[%c7_202, %c0_203, %c256_204] : memref<8x8x512xf32, #tpu.memory_space<vmem>>, vector<1x8x256xf32>
    %373 = vector.shape_cast %372 : vector<1x8x256xf32> to vector<8x256xf32>
    %c0_205 = arith.constant 0 : index
    %c0_206 = arith.constant 0 : index
    %374 = memref.load %arg2[%c0_205, %c0_206] : memref<6x8xf32, #tpu.memory_space<smem>>
    %375 = vector.broadcast %374 : f32 to vector<8x256xf32>
    %376 = arith.mulf %359, %375 : vector<8x256xf32>
    %c0_207 = arith.constant 0 : index
    %c1_208 = arith.constant 1 : index
    %377 = memref.load %arg2[%c0_207, %c1_208] : memref<6x8xf32, #tpu.memory_space<smem>>
    %378 = vector.broadcast %377 : f32 to vector<8x256xf32>
    %379 = arith.mulf %361, %378 : vector<8x256xf32>
    %380 = arith.addf %376, %379 : vector<8x256xf32>
    %c0_209 = arith.constant 0 : index
    %c2_210 = arith.constant 2 : index
    %381 = memref.load %arg2[%c0_209, %c2_210] : memref<6x8xf32, #tpu.memory_space<smem>>
    %382 = vector.broadcast %381 : f32 to vector<8x256xf32>
    %383 = arith.mulf %363, %382 : vector<8x256xf32>
    %384 = arith.addf %380, %383 : vector<8x256xf32>
    %c0_211 = arith.constant 0 : index
    %c3_212 = arith.constant 3 : index
    %385 = memref.load %arg2[%c0_211, %c3_212] : memref<6x8xf32, #tpu.memory_space<smem>>
    %386 = vector.broadcast %385 : f32 to vector<8x256xf32>
    %387 = arith.mulf %365, %386 : vector<8x256xf32>
    %388 = arith.addf %384, %387 : vector<8x256xf32>
    %c0_213 = arith.constant 0 : index
    %c4_214 = arith.constant 4 : index
    %389 = memref.load %arg2[%c0_213, %c4_214] : memref<6x8xf32, #tpu.memory_space<smem>>
    %390 = vector.broadcast %389 : f32 to vector<8x256xf32>
    %391 = arith.mulf %367, %390 : vector<8x256xf32>
    %392 = arith.addf %388, %391 : vector<8x256xf32>
    %c0_215 = arith.constant 0 : index
    %c5_216 = arith.constant 5 : index
    %393 = memref.load %arg2[%c0_215, %c5_216] : memref<6x8xf32, #tpu.memory_space<smem>>
    %394 = vector.broadcast %393 : f32 to vector<8x256xf32>
    %395 = arith.mulf %369, %394 : vector<8x256xf32>
    %396 = arith.addf %392, %395 : vector<8x256xf32>
    %c0_217 = arith.constant 0 : index
    %c6_218 = arith.constant 6 : index
    %397 = memref.load %arg2[%c0_217, %c6_218] : memref<6x8xf32, #tpu.memory_space<smem>>
    %398 = vector.broadcast %397 : f32 to vector<8x256xf32>
    %399 = arith.mulf %371, %398 : vector<8x256xf32>
    %400 = arith.addf %396, %399 : vector<8x256xf32>
    %c0_219 = arith.constant 0 : index
    %c7_220 = arith.constant 7 : index
    %401 = memref.load %arg2[%c0_219, %c7_220] : memref<6x8xf32, #tpu.memory_space<smem>>
    %402 = vector.broadcast %401 : f32 to vector<8x256xf32>
    %403 = arith.mulf %373, %402 : vector<8x256xf32>
    %404 = arith.addf %400, %403 : vector<8x256xf32>
    %c0_221 = arith.constant 0 : index
    %405 = memref.load %arg3[%c0_221] : memref<6xf32, #tpu.memory_space<smem>>
    %406 = vector.broadcast %405 : f32 to vector<8x256xf32>
    %407 = arith.addf %404, %406 : vector<8x256xf32>
    %408 = math.tanh %407 : vector<8x256xf32>
    %c1_222 = arith.constant 1 : index
    %c0_223 = arith.constant 0 : index
    %409 = memref.load %arg2[%c1_222, %c0_223] : memref<6x8xf32, #tpu.memory_space<smem>>
    %410 = vector.broadcast %409 : f32 to vector<8x256xf32>
    %411 = arith.mulf %359, %410 : vector<8x256xf32>
    %c1_224 = arith.constant 1 : index
    %c1_225 = arith.constant 1 : index
    %412 = memref.load %arg2[%c1_224, %c1_225] : memref<6x8xf32, #tpu.memory_space<smem>>
    %413 = vector.broadcast %412 : f32 to vector<8x256xf32>
    %414 = arith.mulf %361, %413 : vector<8x256xf32>
    %415 = arith.addf %411, %414 : vector<8x256xf32>
    %c1_226 = arith.constant 1 : index
    %c2_227 = arith.constant 2 : index
    %416 = memref.load %arg2[%c1_226, %c2_227] : memref<6x8xf32, #tpu.memory_space<smem>>
    %417 = vector.broadcast %416 : f32 to vector<8x256xf32>
    %418 = arith.mulf %363, %417 : vector<8x256xf32>
    %419 = arith.addf %415, %418 : vector<8x256xf32>
    %c1_228 = arith.constant 1 : index
    %c3_229 = arith.constant 3 : index
    %420 = memref.load %arg2[%c1_228, %c3_229] : memref<6x8xf32, #tpu.memory_space<smem>>
    %421 = vector.broadcast %420 : f32 to vector<8x256xf32>
    %422 = arith.mulf %365, %421 : vector<8x256xf32>
    %423 = arith.addf %419, %422 : vector<8x256xf32>
    %c1_230 = arith.constant 1 : index
    %c4_231 = arith.constant 4 : index
    %424 = memref.load %arg2[%c1_230, %c4_231] : memref<6x8xf32, #tpu.memory_space<smem>>
    %425 = vector.broadcast %424 : f32 to vector<8x256xf32>
    %426 = arith.mulf %367, %425 : vector<8x256xf32>
    %427 = arith.addf %423, %426 : vector<8x256xf32>
    %c1_232 = arith.constant 1 : index
    %c5_233 = arith.constant 5 : index
    %428 = memref.load %arg2[%c1_232, %c5_233] : memref<6x8xf32, #tpu.memory_space<smem>>
    %429 = vector.broadcast %428 : f32 to vector<8x256xf32>
    %430 = arith.mulf %369, %429 : vector<8x256xf32>
    %431 = arith.addf %427, %430 : vector<8x256xf32>
    %c1_234 = arith.constant 1 : index
    %c6_235 = arith.constant 6 : index
    %432 = memref.load %arg2[%c1_234, %c6_235] : memref<6x8xf32, #tpu.memory_space<smem>>
    %433 = vector.broadcast %432 : f32 to vector<8x256xf32>
    %434 = arith.mulf %371, %433 : vector<8x256xf32>
    %435 = arith.addf %431, %434 : vector<8x256xf32>
    %c1_236 = arith.constant 1 : index
    %c7_237 = arith.constant 7 : index
    %436 = memref.load %arg2[%c1_236, %c7_237] : memref<6x8xf32, #tpu.memory_space<smem>>
    %437 = vector.broadcast %436 : f32 to vector<8x256xf32>
    %438 = arith.mulf %373, %437 : vector<8x256xf32>
    %439 = arith.addf %435, %438 : vector<8x256xf32>
    %c1_238 = arith.constant 1 : index
    %440 = memref.load %arg3[%c1_238] : memref<6xf32, #tpu.memory_space<smem>>
    %441 = vector.broadcast %440 : f32 to vector<8x256xf32>
    %442 = arith.addf %439, %441 : vector<8x256xf32>
    %443 = math.tanh %442 : vector<8x256xf32>
    %c2_239 = arith.constant 2 : index
    %c0_240 = arith.constant 0 : index
    %444 = memref.load %arg2[%c2_239, %c0_240] : memref<6x8xf32, #tpu.memory_space<smem>>
    %445 = vector.broadcast %444 : f32 to vector<8x256xf32>
    %446 = arith.mulf %359, %445 : vector<8x256xf32>
    %c2_241 = arith.constant 2 : index
    %c1_242 = arith.constant 1 : index
    %447 = memref.load %arg2[%c2_241, %c1_242] : memref<6x8xf32, #tpu.memory_space<smem>>
    %448 = vector.broadcast %447 : f32 to vector<8x256xf32>
    %449 = arith.mulf %361, %448 : vector<8x256xf32>
    %450 = arith.addf %446, %449 : vector<8x256xf32>
    %c2_243 = arith.constant 2 : index
    %c2_244 = arith.constant 2 : index
    %451 = memref.load %arg2[%c2_243, %c2_244] : memref<6x8xf32, #tpu.memory_space<smem>>
    %452 = vector.broadcast %451 : f32 to vector<8x256xf32>
    %453 = arith.mulf %363, %452 : vector<8x256xf32>
    %454 = arith.addf %450, %453 : vector<8x256xf32>
    %c2_245 = arith.constant 2 : index
    %c3_246 = arith.constant 3 : index
    %455 = memref.load %arg2[%c2_245, %c3_246] : memref<6x8xf32, #tpu.memory_space<smem>>
    %456 = vector.broadcast %455 : f32 to vector<8x256xf32>
    %457 = arith.mulf %365, %456 : vector<8x256xf32>
    %458 = arith.addf %454, %457 : vector<8x256xf32>
    %c2_247 = arith.constant 2 : index
    %c4_248 = arith.constant 4 : index
    %459 = memref.load %arg2[%c2_247, %c4_248] : memref<6x8xf32, #tpu.memory_space<smem>>
    %460 = vector.broadcast %459 : f32 to vector<8x256xf32>
    %461 = arith.mulf %367, %460 : vector<8x256xf32>
    %462 = arith.addf %458, %461 : vector<8x256xf32>
    %c2_249 = arith.constant 2 : index
    %c5_250 = arith.constant 5 : index
    %463 = memref.load %arg2[%c2_249, %c5_250] : memref<6x8xf32, #tpu.memory_space<smem>>
    %464 = vector.broadcast %463 : f32 to vector<8x256xf32>
    %465 = arith.mulf %369, %464 : vector<8x256xf32>
    %466 = arith.addf %462, %465 : vector<8x256xf32>
    %c2_251 = arith.constant 2 : index
    %c6_252 = arith.constant 6 : index
    %467 = memref.load %arg2[%c2_251, %c6_252] : memref<6x8xf32, #tpu.memory_space<smem>>
    %468 = vector.broadcast %467 : f32 to vector<8x256xf32>
    %469 = arith.mulf %371, %468 : vector<8x256xf32>
    %470 = arith.addf %466, %469 : vector<8x256xf32>
    %c2_253 = arith.constant 2 : index
    %c7_254 = arith.constant 7 : index
    %471 = memref.load %arg2[%c2_253, %c7_254] : memref<6x8xf32, #tpu.memory_space<smem>>
    %472 = vector.broadcast %471 : f32 to vector<8x256xf32>
    %473 = arith.mulf %373, %472 : vector<8x256xf32>
    %474 = arith.addf %470, %473 : vector<8x256xf32>
    %c2_255 = arith.constant 2 : index
    %475 = memref.load %arg3[%c2_255] : memref<6xf32, #tpu.memory_space<smem>>
    %476 = vector.broadcast %475 : f32 to vector<8x256xf32>
    %477 = arith.addf %474, %476 : vector<8x256xf32>
    %478 = math.tanh %477 : vector<8x256xf32>
    %c3_256 = arith.constant 3 : index
    %c0_257 = arith.constant 0 : index
    %479 = memref.load %arg2[%c3_256, %c0_257] : memref<6x8xf32, #tpu.memory_space<smem>>
    %480 = vector.broadcast %479 : f32 to vector<8x256xf32>
    %481 = arith.mulf %359, %480 : vector<8x256xf32>
    %c3_258 = arith.constant 3 : index
    %c1_259 = arith.constant 1 : index
    %482 = memref.load %arg2[%c3_258, %c1_259] : memref<6x8xf32, #tpu.memory_space<smem>>
    %483 = vector.broadcast %482 : f32 to vector<8x256xf32>
    %484 = arith.mulf %361, %483 : vector<8x256xf32>
    %485 = arith.addf %481, %484 : vector<8x256xf32>
    %c3_260 = arith.constant 3 : index
    %c2_261 = arith.constant 2 : index
    %486 = memref.load %arg2[%c3_260, %c2_261] : memref<6x8xf32, #tpu.memory_space<smem>>
    %487 = vector.broadcast %486 : f32 to vector<8x256xf32>
    %488 = arith.mulf %363, %487 : vector<8x256xf32>
    %489 = arith.addf %485, %488 : vector<8x256xf32>
    %c3_262 = arith.constant 3 : index
    %c3_263 = arith.constant 3 : index
    %490 = memref.load %arg2[%c3_262, %c3_263] : memref<6x8xf32, #tpu.memory_space<smem>>
    %491 = vector.broadcast %490 : f32 to vector<8x256xf32>
    %492 = arith.mulf %365, %491 : vector<8x256xf32>
    %493 = arith.addf %489, %492 : vector<8x256xf32>
    %c3_264 = arith.constant 3 : index
    %c4_265 = arith.constant 4 : index
    %494 = memref.load %arg2[%c3_264, %c4_265] : memref<6x8xf32, #tpu.memory_space<smem>>
    %495 = vector.broadcast %494 : f32 to vector<8x256xf32>
    %496 = arith.mulf %367, %495 : vector<8x256xf32>
    %497 = arith.addf %493, %496 : vector<8x256xf32>
    %c3_266 = arith.constant 3 : index
    %c5_267 = arith.constant 5 : index
    %498 = memref.load %arg2[%c3_266, %c5_267] : memref<6x8xf32, #tpu.memory_space<smem>>
    %499 = vector.broadcast %498 : f32 to vector<8x256xf32>
    %500 = arith.mulf %369, %499 : vector<8x256xf32>
    %501 = arith.addf %497, %500 : vector<8x256xf32>
    %c3_268 = arith.constant 3 : index
    %c6_269 = arith.constant 6 : index
    %502 = memref.load %arg2[%c3_268, %c6_269] : memref<6x8xf32, #tpu.memory_space<smem>>
    %503 = vector.broadcast %502 : f32 to vector<8x256xf32>
    %504 = arith.mulf %371, %503 : vector<8x256xf32>
    %505 = arith.addf %501, %504 : vector<8x256xf32>
    %c3_270 = arith.constant 3 : index
    %c7_271 = arith.constant 7 : index
    %506 = memref.load %arg2[%c3_270, %c7_271] : memref<6x8xf32, #tpu.memory_space<smem>>
    %507 = vector.broadcast %506 : f32 to vector<8x256xf32>
    %508 = arith.mulf %373, %507 : vector<8x256xf32>
    %509 = arith.addf %505, %508 : vector<8x256xf32>
    %c3_272 = arith.constant 3 : index
    %510 = memref.load %arg3[%c3_272] : memref<6xf32, #tpu.memory_space<smem>>
    %511 = vector.broadcast %510 : f32 to vector<8x256xf32>
    %512 = arith.addf %509, %511 : vector<8x256xf32>
    %513 = math.tanh %512 : vector<8x256xf32>
    %c4_273 = arith.constant 4 : index
    %c0_274 = arith.constant 0 : index
    %514 = memref.load %arg2[%c4_273, %c0_274] : memref<6x8xf32, #tpu.memory_space<smem>>
    %515 = vector.broadcast %514 : f32 to vector<8x256xf32>
    %516 = arith.mulf %359, %515 : vector<8x256xf32>
    %c4_275 = arith.constant 4 : index
    %c1_276 = arith.constant 1 : index
    %517 = memref.load %arg2[%c4_275, %c1_276] : memref<6x8xf32, #tpu.memory_space<smem>>
    %518 = vector.broadcast %517 : f32 to vector<8x256xf32>
    %519 = arith.mulf %361, %518 : vector<8x256xf32>
    %520 = arith.addf %516, %519 : vector<8x256xf32>
    %c4_277 = arith.constant 4 : index
    %c2_278 = arith.constant 2 : index
    %521 = memref.load %arg2[%c4_277, %c2_278] : memref<6x8xf32, #tpu.memory_space<smem>>
    %522 = vector.broadcast %521 : f32 to vector<8x256xf32>
    %523 = arith.mulf %363, %522 : vector<8x256xf32>
    %524 = arith.addf %520, %523 : vector<8x256xf32>
    %c4_279 = arith.constant 4 : index
    %c3_280 = arith.constant 3 : index
    %525 = memref.load %arg2[%c4_279, %c3_280] : memref<6x8xf32, #tpu.memory_space<smem>>
    %526 = vector.broadcast %525 : f32 to vector<8x256xf32>
    %527 = arith.mulf %365, %526 : vector<8x256xf32>
    %528 = arith.addf %524, %527 : vector<8x256xf32>
    %c4_281 = arith.constant 4 : index
    %c4_282 = arith.constant 4 : index
    %529 = memref.load %arg2[%c4_281, %c4_282] : memref<6x8xf32, #tpu.memory_space<smem>>
    %530 = vector.broadcast %529 : f32 to vector<8x256xf32>
    %531 = arith.mulf %367, %530 : vector<8x256xf32>
    %532 = arith.addf %528, %531 : vector<8x256xf32>
    %c4_283 = arith.constant 4 : index
    %c5_284 = arith.constant 5 : index
    %533 = memref.load %arg2[%c4_283, %c5_284] : memref<6x8xf32, #tpu.memory_space<smem>>
    %534 = vector.broadcast %533 : f32 to vector<8x256xf32>
    %535 = arith.mulf %369, %534 : vector<8x256xf32>
    %536 = arith.addf %532, %535 : vector<8x256xf32>
    %c4_285 = arith.constant 4 : index
    %c6_286 = arith.constant 6 : index
    %537 = memref.load %arg2[%c4_285, %c6_286] : memref<6x8xf32, #tpu.memory_space<smem>>
    %538 = vector.broadcast %537 : f32 to vector<8x256xf32>
    %539 = arith.mulf %371, %538 : vector<8x256xf32>
    %540 = arith.addf %536, %539 : vector<8x256xf32>
    %c4_287 = arith.constant 4 : index
    %c7_288 = arith.constant 7 : index
    %541 = memref.load %arg2[%c4_287, %c7_288] : memref<6x8xf32, #tpu.memory_space<smem>>
    %542 = vector.broadcast %541 : f32 to vector<8x256xf32>
    %543 = arith.mulf %373, %542 : vector<8x256xf32>
    %544 = arith.addf %540, %543 : vector<8x256xf32>
    %c4_289 = arith.constant 4 : index
    %545 = memref.load %arg3[%c4_289] : memref<6xf32, #tpu.memory_space<smem>>
    %546 = vector.broadcast %545 : f32 to vector<8x256xf32>
    %547 = arith.addf %544, %546 : vector<8x256xf32>
    %548 = math.tanh %547 : vector<8x256xf32>
    %c5_290 = arith.constant 5 : index
    %c0_291 = arith.constant 0 : index
    %549 = memref.load %arg2[%c5_290, %c0_291] : memref<6x8xf32, #tpu.memory_space<smem>>
    %550 = vector.broadcast %549 : f32 to vector<8x256xf32>
    %551 = arith.mulf %359, %550 : vector<8x256xf32>
    %c5_292 = arith.constant 5 : index
    %c1_293 = arith.constant 1 : index
    %552 = memref.load %arg2[%c5_292, %c1_293] : memref<6x8xf32, #tpu.memory_space<smem>>
    %553 = vector.broadcast %552 : f32 to vector<8x256xf32>
    %554 = arith.mulf %361, %553 : vector<8x256xf32>
    %555 = arith.addf %551, %554 : vector<8x256xf32>
    %c5_294 = arith.constant 5 : index
    %c2_295 = arith.constant 2 : index
    %556 = memref.load %arg2[%c5_294, %c2_295] : memref<6x8xf32, #tpu.memory_space<smem>>
    %557 = vector.broadcast %556 : f32 to vector<8x256xf32>
    %558 = arith.mulf %363, %557 : vector<8x256xf32>
    %559 = arith.addf %555, %558 : vector<8x256xf32>
    %c5_296 = arith.constant 5 : index
    %c3_297 = arith.constant 3 : index
    %560 = memref.load %arg2[%c5_296, %c3_297] : memref<6x8xf32, #tpu.memory_space<smem>>
    %561 = vector.broadcast %560 : f32 to vector<8x256xf32>
    %562 = arith.mulf %365, %561 : vector<8x256xf32>
    %563 = arith.addf %559, %562 : vector<8x256xf32>
    %c5_298 = arith.constant 5 : index
    %c4_299 = arith.constant 4 : index
    %564 = memref.load %arg2[%c5_298, %c4_299] : memref<6x8xf32, #tpu.memory_space<smem>>
    %565 = vector.broadcast %564 : f32 to vector<8x256xf32>
    %566 = arith.mulf %367, %565 : vector<8x256xf32>
    %567 = arith.addf %563, %566 : vector<8x256xf32>
    %c5_300 = arith.constant 5 : index
    %c5_301 = arith.constant 5 : index
    %568 = memref.load %arg2[%c5_300, %c5_301] : memref<6x8xf32, #tpu.memory_space<smem>>
    %569 = vector.broadcast %568 : f32 to vector<8x256xf32>
    %570 = arith.mulf %369, %569 : vector<8x256xf32>
    %571 = arith.addf %567, %570 : vector<8x256xf32>
    %c5_302 = arith.constant 5 : index
    %c6_303 = arith.constant 6 : index
    %572 = memref.load %arg2[%c5_302, %c6_303] : memref<6x8xf32, #tpu.memory_space<smem>>
    %573 = vector.broadcast %572 : f32 to vector<8x256xf32>
    %574 = arith.mulf %371, %573 : vector<8x256xf32>
    %575 = arith.addf %571, %574 : vector<8x256xf32>
    %c5_304 = arith.constant 5 : index
    %c7_305 = arith.constant 7 : index
    %576 = memref.load %arg2[%c5_304, %c7_305] : memref<6x8xf32, #tpu.memory_space<smem>>
    %577 = vector.broadcast %576 : f32 to vector<8x256xf32>
    %578 = arith.mulf %373, %577 : vector<8x256xf32>
    %579 = arith.addf %575, %578 : vector<8x256xf32>
    %c5_306 = arith.constant 5 : index
    %580 = memref.load %arg3[%c5_306] : memref<6xf32, #tpu.memory_space<smem>>
    %581 = vector.broadcast %580 : f32 to vector<8x256xf32>
    %582 = arith.addf %579, %581 : vector<8x256xf32>
    %583 = math.tanh %582 : vector<8x256xf32>
    %c0_307 = arith.constant 0 : index
    %c0_308 = arith.constant 0 : index
    %584 = memref.load %arg4[%c0_307, %c0_308] : memref<4x6xf32, #tpu.memory_space<smem>>
    %585 = vector.broadcast %584 : f32 to vector<8x256xf32>
    %586 = arith.mulf %408, %585 : vector<8x256xf32>
    %c0_309 = arith.constant 0 : index
    %c1_310 = arith.constant 1 : index
    %587 = memref.load %arg4[%c0_309, %c1_310] : memref<4x6xf32, #tpu.memory_space<smem>>
    %588 = vector.broadcast %587 : f32 to vector<8x256xf32>
    %589 = arith.mulf %443, %588 : vector<8x256xf32>
    %590 = arith.addf %586, %589 : vector<8x256xf32>
    %c0_311 = arith.constant 0 : index
    %c2_312 = arith.constant 2 : index
    %591 = memref.load %arg4[%c0_311, %c2_312] : memref<4x6xf32, #tpu.memory_space<smem>>
    %592 = vector.broadcast %591 : f32 to vector<8x256xf32>
    %593 = arith.mulf %478, %592 : vector<8x256xf32>
    %594 = arith.addf %590, %593 : vector<8x256xf32>
    %c0_313 = arith.constant 0 : index
    %c3_314 = arith.constant 3 : index
    %595 = memref.load %arg4[%c0_313, %c3_314] : memref<4x6xf32, #tpu.memory_space<smem>>
    %596 = vector.broadcast %595 : f32 to vector<8x256xf32>
    %597 = arith.mulf %513, %596 : vector<8x256xf32>
    %598 = arith.addf %594, %597 : vector<8x256xf32>
    %c0_315 = arith.constant 0 : index
    %c4_316 = arith.constant 4 : index
    %599 = memref.load %arg4[%c0_315, %c4_316] : memref<4x6xf32, #tpu.memory_space<smem>>
    %600 = vector.broadcast %599 : f32 to vector<8x256xf32>
    %601 = arith.mulf %548, %600 : vector<8x256xf32>
    %602 = arith.addf %598, %601 : vector<8x256xf32>
    %c0_317 = arith.constant 0 : index
    %c5_318 = arith.constant 5 : index
    %603 = memref.load %arg4[%c0_317, %c5_318] : memref<4x6xf32, #tpu.memory_space<smem>>
    %604 = vector.broadcast %603 : f32 to vector<8x256xf32>
    %605 = arith.mulf %583, %604 : vector<8x256xf32>
    %606 = arith.addf %602, %605 : vector<8x256xf32>
    %c0_319 = arith.constant 0 : index
    %607 = memref.load %arg5[%c0_319] : memref<4xf32, #tpu.memory_space<smem>>
    %608 = vector.broadcast %607 : f32 to vector<8x256xf32>
    %609 = arith.addf %606, %608 : vector<8x256xf32>
    %610 = math.tanh %609 : vector<8x256xf32>
    %c1_320 = arith.constant 1 : index
    %c0_321 = arith.constant 0 : index
    %611 = memref.load %arg4[%c1_320, %c0_321] : memref<4x6xf32, #tpu.memory_space<smem>>
    %612 = vector.broadcast %611 : f32 to vector<8x256xf32>
    %613 = arith.mulf %408, %612 : vector<8x256xf32>
    %c1_322 = arith.constant 1 : index
    %c1_323 = arith.constant 1 : index
    %614 = memref.load %arg4[%c1_322, %c1_323] : memref<4x6xf32, #tpu.memory_space<smem>>
    %615 = vector.broadcast %614 : f32 to vector<8x256xf32>
    %616 = arith.mulf %443, %615 : vector<8x256xf32>
    %617 = arith.addf %613, %616 : vector<8x256xf32>
    %c1_324 = arith.constant 1 : index
    %c2_325 = arith.constant 2 : index
    %618 = memref.load %arg4[%c1_324, %c2_325] : memref<4x6xf32, #tpu.memory_space<smem>>
    %619 = vector.broadcast %618 : f32 to vector<8x256xf32>
    %620 = arith.mulf %478, %619 : vector<8x256xf32>
    %621 = arith.addf %617, %620 : vector<8x256xf32>
    %c1_326 = arith.constant 1 : index
    %c3_327 = arith.constant 3 : index
    %622 = memref.load %arg4[%c1_326, %c3_327] : memref<4x6xf32, #tpu.memory_space<smem>>
    %623 = vector.broadcast %622 : f32 to vector<8x256xf32>
    %624 = arith.mulf %513, %623 : vector<8x256xf32>
    %625 = arith.addf %621, %624 : vector<8x256xf32>
    %c1_328 = arith.constant 1 : index
    %c4_329 = arith.constant 4 : index
    %626 = memref.load %arg4[%c1_328, %c4_329] : memref<4x6xf32, #tpu.memory_space<smem>>
    %627 = vector.broadcast %626 : f32 to vector<8x256xf32>
    %628 = arith.mulf %548, %627 : vector<8x256xf32>
    %629 = arith.addf %625, %628 : vector<8x256xf32>
    %c1_330 = arith.constant 1 : index
    %c5_331 = arith.constant 5 : index
    %630 = memref.load %arg4[%c1_330, %c5_331] : memref<4x6xf32, #tpu.memory_space<smem>>
    %631 = vector.broadcast %630 : f32 to vector<8x256xf32>
    %632 = arith.mulf %583, %631 : vector<8x256xf32>
    %633 = arith.addf %629, %632 : vector<8x256xf32>
    %c1_332 = arith.constant 1 : index
    %634 = memref.load %arg5[%c1_332] : memref<4xf32, #tpu.memory_space<smem>>
    %635 = vector.broadcast %634 : f32 to vector<8x256xf32>
    %636 = arith.addf %633, %635 : vector<8x256xf32>
    %637 = math.tanh %636 : vector<8x256xf32>
    %c2_333 = arith.constant 2 : index
    %c0_334 = arith.constant 0 : index
    %638 = memref.load %arg4[%c2_333, %c0_334] : memref<4x6xf32, #tpu.memory_space<smem>>
    %639 = vector.broadcast %638 : f32 to vector<8x256xf32>
    %640 = arith.mulf %408, %639 : vector<8x256xf32>
    %c2_335 = arith.constant 2 : index
    %c1_336 = arith.constant 1 : index
    %641 = memref.load %arg4[%c2_335, %c1_336] : memref<4x6xf32, #tpu.memory_space<smem>>
    %642 = vector.broadcast %641 : f32 to vector<8x256xf32>
    %643 = arith.mulf %443, %642 : vector<8x256xf32>
    %644 = arith.addf %640, %643 : vector<8x256xf32>
    %c2_337 = arith.constant 2 : index
    %c2_338 = arith.constant 2 : index
    %645 = memref.load %arg4[%c2_337, %c2_338] : memref<4x6xf32, #tpu.memory_space<smem>>
    %646 = vector.broadcast %645 : f32 to vector<8x256xf32>
    %647 = arith.mulf %478, %646 : vector<8x256xf32>
    %648 = arith.addf %644, %647 : vector<8x256xf32>
    %c2_339 = arith.constant 2 : index
    %c3_340 = arith.constant 3 : index
    %649 = memref.load %arg4[%c2_339, %c3_340] : memref<4x6xf32, #tpu.memory_space<smem>>
    %650 = vector.broadcast %649 : f32 to vector<8x256xf32>
    %651 = arith.mulf %513, %650 : vector<8x256xf32>
    %652 = arith.addf %648, %651 : vector<8x256xf32>
    %c2_341 = arith.constant 2 : index
    %c4_342 = arith.constant 4 : index
    %653 = memref.load %arg4[%c2_341, %c4_342] : memref<4x6xf32, #tpu.memory_space<smem>>
    %654 = vector.broadcast %653 : f32 to vector<8x256xf32>
    %655 = arith.mulf %548, %654 : vector<8x256xf32>
    %656 = arith.addf %652, %655 : vector<8x256xf32>
    %c2_343 = arith.constant 2 : index
    %c5_344 = arith.constant 5 : index
    %657 = memref.load %arg4[%c2_343, %c5_344] : memref<4x6xf32, #tpu.memory_space<smem>>
    %658 = vector.broadcast %657 : f32 to vector<8x256xf32>
    %659 = arith.mulf %583, %658 : vector<8x256xf32>
    %660 = arith.addf %656, %659 : vector<8x256xf32>
    %c2_345 = arith.constant 2 : index
    %661 = memref.load %arg5[%c2_345] : memref<4xf32, #tpu.memory_space<smem>>
    %662 = vector.broadcast %661 : f32 to vector<8x256xf32>
    %663 = arith.addf %660, %662 : vector<8x256xf32>
    %664 = math.tanh %663 : vector<8x256xf32>
    %c3_346 = arith.constant 3 : index
    %c0_347 = arith.constant 0 : index
    %665 = memref.load %arg4[%c3_346, %c0_347] : memref<4x6xf32, #tpu.memory_space<smem>>
    %666 = vector.broadcast %665 : f32 to vector<8x256xf32>
    %667 = arith.mulf %408, %666 : vector<8x256xf32>
    %c3_348 = arith.constant 3 : index
    %c1_349 = arith.constant 1 : index
    %668 = memref.load %arg4[%c3_348, %c1_349] : memref<4x6xf32, #tpu.memory_space<smem>>
    %669 = vector.broadcast %668 : f32 to vector<8x256xf32>
    %670 = arith.mulf %443, %669 : vector<8x256xf32>
    %671 = arith.addf %667, %670 : vector<8x256xf32>
    %c3_350 = arith.constant 3 : index
    %c2_351 = arith.constant 2 : index
    %672 = memref.load %arg4[%c3_350, %c2_351] : memref<4x6xf32, #tpu.memory_space<smem>>
    %673 = vector.broadcast %672 : f32 to vector<8x256xf32>
    %674 = arith.mulf %478, %673 : vector<8x256xf32>
    %675 = arith.addf %671, %674 : vector<8x256xf32>
    %c3_352 = arith.constant 3 : index
    %c3_353 = arith.constant 3 : index
    %676 = memref.load %arg4[%c3_352, %c3_353] : memref<4x6xf32, #tpu.memory_space<smem>>
    %677 = vector.broadcast %676 : f32 to vector<8x256xf32>
    %678 = arith.mulf %513, %677 : vector<8x256xf32>
    %679 = arith.addf %675, %678 : vector<8x256xf32>
    %c3_354 = arith.constant 3 : index
    %c4_355 = arith.constant 4 : index
    %680 = memref.load %arg4[%c3_354, %c4_355] : memref<4x6xf32, #tpu.memory_space<smem>>
    %681 = vector.broadcast %680 : f32 to vector<8x256xf32>
    %682 = arith.mulf %548, %681 : vector<8x256xf32>
    %683 = arith.addf %679, %682 : vector<8x256xf32>
    %c3_356 = arith.constant 3 : index
    %c5_357 = arith.constant 5 : index
    %684 = memref.load %arg4[%c3_356, %c5_357] : memref<4x6xf32, #tpu.memory_space<smem>>
    %685 = vector.broadcast %684 : f32 to vector<8x256xf32>
    %686 = arith.mulf %583, %685 : vector<8x256xf32>
    %687 = arith.addf %683, %686 : vector<8x256xf32>
    %c3_358 = arith.constant 3 : index
    %688 = memref.load %arg5[%c3_358] : memref<4xf32, #tpu.memory_space<smem>>
    %689 = vector.broadcast %688 : f32 to vector<8x256xf32>
    %690 = arith.addf %687, %689 : vector<8x256xf32>
    %691 = math.tanh %690 : vector<8x256xf32>
    %c0_359 = arith.constant 0 : index
    %c0_360 = arith.constant 0 : index
    %692 = memref.load %arg6[%c0_359, %c0_360] : memref<1x4xf32, #tpu.memory_space<smem>>
    %693 = vector.broadcast %692 : f32 to vector<8x256xf32>
    %694 = arith.mulf %610, %693 : vector<8x256xf32>
    %c0_361 = arith.constant 0 : index
    %c1_362 = arith.constant 1 : index
    %695 = memref.load %arg6[%c0_361, %c1_362] : memref<1x4xf32, #tpu.memory_space<smem>>
    %696 = vector.broadcast %695 : f32 to vector<8x256xf32>
    %697 = arith.mulf %637, %696 : vector<8x256xf32>
    %698 = arith.addf %694, %697 : vector<8x256xf32>
    %c0_363 = arith.constant 0 : index
    %c2_364 = arith.constant 2 : index
    %699 = memref.load %arg6[%c0_363, %c2_364] : memref<1x4xf32, #tpu.memory_space<smem>>
    %700 = vector.broadcast %699 : f32 to vector<8x256xf32>
    %701 = arith.mulf %664, %700 : vector<8x256xf32>
    %702 = arith.addf %698, %701 : vector<8x256xf32>
    %c0_365 = arith.constant 0 : index
    %c3_366 = arith.constant 3 : index
    %703 = memref.load %arg6[%c0_365, %c3_366] : memref<1x4xf32, #tpu.memory_space<smem>>
    %704 = vector.broadcast %703 : f32 to vector<8x256xf32>
    %705 = arith.mulf %691, %704 : vector<8x256xf32>
    %706 = arith.addf %702, %705 : vector<8x256xf32>
    %c0_367 = arith.constant 0 : index
    %707 = memref.load %arg7[%c0_367] : memref<1xf32, #tpu.memory_space<smem>>
    %708 = vector.broadcast %707 : f32 to vector<8x256xf32>
    %709 = arith.addf %706, %708 : vector<8x256xf32>
    %710 = math.tanh %709 : vector<8x256xf32>
    %cst_368 = arith.constant 5.000000e-01 : f32
    %711 = vector.broadcast %cst_368 : f32 to vector<8x256xf32>
    %712 = arith.mulf %711, %710 : vector<8x256xf32>
    %cst_369 = arith.constant 5.000000e-01 : f32
    %713 = vector.broadcast %cst_369 : f32 to vector<8x256xf32>
    %714 = arith.addf %712, %713 : vector<8x256xf32>
    %c0_370 = arith.constant 0 : index
    %c256_371 = arith.constant 256 : index
    %715 = vector.load %arg8[%c0_370, %c256_371] : memref<8x512xf32, #tpu.memory_space<vmem>>, vector<8x256xf32>
    tpu.vector_store %arg8[%c0_370, %c256_371], %714 {strides = array<i32>} : memref<8x512xf32, #tpu.memory_space<vmem>>, vector<8x256xf32>,
    return
  }
  func.func @transform_0(%arg0: i32) -> (i32, i32, i32) {
    %c0_i32 = arith.constant 0 : i32
    %c0_i32_0 = arith.constant 0 : i32
    %c0_i32_1 = arith.constant 0 : i32
    return %c0_i32, %c0_i32_0, %arg0 : i32, i32, i32
  }
  func.func @transform_1(%arg0: i32) -> (i32, i32) {
    %c0_i32 = arith.constant 0 : i32
    %c0_i32_0 = arith.constant 0 : i32
    %c0_i32_1 = arith.constant 0 : i32
    return %c0_i32, %c0_i32_0 : i32, i32
  }
  func.func @transform_2(%arg0: i32) -> i32 {
    %c0_i32 = arith.constant 0 : i32
    %c0_i32_0 = arith.constant 0 : i32
    return %c0_i32 : i32
  }
  func.func @transform_3(%arg0: i32) -> (i32, i32) {
    %c0_i32 = arith.constant 0 : i32
    %c0_i32_0 = arith.constant 0 : i32
    %c0_i32_1 = arith.constant 0 : i32
    return %c0_i32, %c0_i32_0 : i32, i32
  }
  func.func @transform_4(%arg0: i32) -> i32 {
    %c0_i32 = arith.constant 0 : i32
    %c0_i32_0 = arith.constant 0 : i32
    return %c0_i32 : i32
  }
  func.func @transform_5(%arg0: i32) -> (i32, i32) {
    %c0_i32 = arith.constant 0 : i32
    %c0_i32_0 = arith.constant 0 : i32
    %c0_i32_1 = arith.constant 0 : i32
    return %c0_i32, %c0_i32_0 : i32, i32
  }
  func.func @transform_6(%arg0: i32) -> i32 {
    %c0_i32 = arith.constant 0 : i32
    %c0_i32_0 = arith.constant 0 : i32
    return %c0_i32 : i32
  }
  func.func @transform_7(%arg0: i32) -> (i32, i32) {
    %c0_i32 = arith.constant 0 : i32
    %c0_i32_0 = arith.constant 0 : i32
    return %c0_i32, %arg0 : i32, i32
  }
}

</mosaic_0001>

<llo_original>
// kernel: mlp_forward.1
$region0: #{mlp_forward.1}
  #allocation0 [shape = 'u32[]', space=smem, size = 0x4, offset = 0x4, fixed_abs, tag = 'smem constant byte address 0x4 - core index']
  #allocation1 [shape = 'u32[144,128]{1,0:T(1,128)}', space=vmem, size = 0x12000, scoped, tag = 'internal scratch']
  #allocation2 [shape = 'f32[1]{0:T(128)S(6)}', space=smem, size = 0x200, scoped, tag = 'scoped memory for mlp_forward.1']
  %s0 = inlined_call_operand.vmem [shape: f32[8,8,1024], index: 0, kind: input, shape index: {}]
  %s1 = inlined_call_operand.vmem [shape: f32[6,8], index: 1, kind: input, shape index: {}]
  %s2 = inlined_call_operand.vmem [shape: f32[6], index: 2, kind: input, shape index: {}]
  %s3 = inlined_call_operand.vmem [shape: f32[4,6], index: 3, kind: input, shape index: {}]
  %s4 = inlined_call_operand.vmem [shape: f32[4], index: 4, kind: input, shape index: {}]
  %s5 = inlined_call_operand.vmem [shape: f32[1,4], index: 5, kind: input, shape index: {}]
  %s6 = inlined_call_operand.<no memory space> [shape: f32[1], index: 6, kind: input, shape index: {}]
  %s7 = inlined_call_operand.vmem [shape: f32[8,1024], index: 7, kind: output, shape index: {}]
  %s8 = sld [smem:[#allocation0]]
  $region104: #{mlp_forward.1} parent=0
    _
  %s10 = ssub.s32 1, %s8
  %s11 = scalar_select 0, %s10, %s8
  %12 = sst [smem:[#allocation2]] %s6
  $region1: #{mlp_forward.1} parent=0
    #allocation3 [shape = 'u8[262144]{0}', space=vmem, size = 0x40000, scoped, tag = 'input window, operand 0']
    #allocation4 [shape = 'u8[4096]{0}', space=smem, size = 0x1000, scoped, tag = 'input window, operand 1, single buffered']
    #allocation5 [shape = 's32[2]{0}', space=sflag, size = 0x8, scoped, tag = 'scoped memory for mlp_forward.1']
    #allocation6 [shape = 'u8[512]{0}', space=smem, size = 0x200, scoped, tag = 'input window, operand 2, single buffered']
    #allocation7 [shape = 's32[1]{0}', space=sflag, size = 0x4, scoped, tag = 'scoped memory for mlp_forward.1']
    #allocation8 [shape = 'u8[2048]{0}', space=smem, size = 0x800, scoped, tag = 'input window, operand 3, single buffered']
    #allocation9 [shape = 'u8[512]{0}', space=smem, size = 0x200, scoped, tag = 'input window, operand 4, single buffered']
    #allocation10 [shape = 's32[1]{0}', space=sflag, size = 0x4, scoped, tag = 'scoped memory for mlp_forward.1']
    #allocation11 [shape = 'u8[512]{0}', space=smem, size = 0x200, scoped, tag = 'input window, operand 5, single buffered']
    %13 = vsyncpa [#allocation5], 0
    %14 = vsyncpa [#allocation7], 0
    %15 = vsyncpa [#allocation10], 0
    loop: start=0, step=1, limit=4
    $region2: #{mlp_forward.1} parent=1 // loop_pre_header
      _
    $region3: #{mlp_forward.1} parent=1 // loop_header
      %s17 = sphi 0, %s21
      %p18 = scmp.ge.s32.totalorder %s17, 4
      %s27 = sphi 0, %s29
      %s30 = sphi 0, %s27
      %s31 = sphi 0, %s30
      %s47 = sphi 0, %s31
      %s51 = sphi 0, %s51
      %s53 = sphi 0, %s51
      %s54 = sphi 0, %s53
      %s68 = sphi 0, %s54
      %s72 = sphi 0, %s72
      %s74 = sphi 0, %s72
      %s75 = sphi 0, %s74
      %s89 = sphi 0, %s75
      %s93 = sphi 0, %s93
      %s95 = sphi 0, %s93
      %s96 = sphi 0, %s95
      %s110 = sphi 0, %s96
      %s114 = sphi 0, %s114
      %s116 = sphi 0, %s114
      %s117 = sphi 0, %s116
      %s131 = sphi 0, %s117
      %s135 = sphi 0, %s135
      %s137 = sphi 0, %s135
      %s138 = sphi 0, %s137
      %s152 = sphi 0, %s138
      %s156 = sphi 0, %s156
      %s158 = sphi 0, %s156
      %s159 = sphi 0, %s158
      %s173 = sphi 0, %s159
      %s179 = sphi 0, %s181
      %s182 = sphi 0, %s179
      %s183 = sphi 0, %s182
      %s199 = sphi 0, %s183
    $region4: #{mlp_forward.1} parent=1 // loop_header_branch
      %20 = sbr.rel (%p18) target = $region8
    $region5: #{mlp_forward.1} parent=1 // loop_body
      %s22 = ssub.s32 %s17, 1
      %s23 = ssub.s32 %s17, 2
      %s24 = sadd.s32 %s17, 1
      %s25 = ssub.s32 %s17, %s24
      %p26 = scmp.eq.s32.totalorder %s25, 0
      %s28 = sadd.s32 %s27, 1
      %s29 = scalar_select %p26, %s27, %s28
      %p32 = pneg %p26
      %p33 = scmp.eq.s32.totalorder %s17, 1
      %p34 = por %p32, %p33
      %p35 = scmp.ne.s32.totalorder %s27, %s30
      %p36 = scmp.eq.s32.totalorder %s17, 0
      %p37 = por %p35, %p36
      %p38 = scmp.ne.s32.totalorder %s27, %s30
      %p39 = scmp.eq.s32.totalorder %s22, 1
      %p40 = por %p38, %p39
      %p41 = scmp.ne.s32.totalorder %s30, %s31
      %p42 = scmp.eq.s32.totalorder %s22, 0
      %p43 = por %p41, %p42
      %p44 = scmp.ne.s32.totalorder %s30, %s31
      %p45 = scmp.eq.s32.totalorder %s23, 1
      %p46 = por %p44, %p45
      %p48 = scmp.ne.s32.totalorder %s31, %s47
      %p49 = scmp.eq.s32.totalorder %s23, 0
      %p50 = por %p48, %p49
      %s52 = sadd.s32 %s51, 1
      %p55 = scmp.eq.s32.totalorder %s17, 1
      %p56 = scmp.ne.s32.totalorder %s51, %s53
      %p57 = scmp.eq.s32.totalorder %s17, 0
      %p58 = por %p56, %p57
      %p59 = scmp.ne.s32.totalorder %s51, %s53
      %p60 = scmp.eq.s32.totalorder %s22, 1
      %p61 = por %p59, %p60
      %p62 = scmp.ne.s32.totalorder %s53, %s54
      %p63 = scmp.eq.s32.totalorder %s22, 0
      %p64 = por %p62, %p63
      %p65 = scmp.ne.s32.totalorder %s53, %s54
      %p66 = scmp.eq.s32.totalorder %s23, 1
      %p67 = por %p65, %p66
      %p69 = scmp.ne.s32.totalorder %s54, %s68
      %p70 = scmp.eq.s32.totalorder %s23, 0
      %p71 = por %p69, %p70
      %s73 = sadd.s32 %s72, 1
      %p76 = scmp.eq.s32.totalorder %s17, 1
      %p77 = scmp.ne.s32.totalorder %s72, %s74
      %p78 = scmp.eq.s32.totalorder %s17, 0
      %p79 = por %p77, %p78
      %p80 = scmp.ne.s32.totalorder %s72, %s74
      %p81 = scmp.eq.s32.totalorder %s22, 1
      %p82 = por %p80, %p81
      %p83 = scmp.ne.s32.totalorder %s74, %s75
      %p84 = scmp.eq.s32.totalorder %s22, 0
      %p85 = por %p83, %p84
      %p86 = scmp.ne.s32.totalorder %s74, %s75
      %p87 = scmp.eq.s32.totalorder %s23, 1
      %p88 = por %p86, %p87
      %p90 = scmp.ne.s32.totalorder %s75, %s89
      %p91 = scmp.eq.s32.totalorder %s23, 0
      %p92 = por %p90, %p91
      %s94 = sadd.s32 %s93, 1
      %p97 = scmp.eq.s32.totalorder %s17, 1
      %p98 = scmp.ne.s32.totalorder %s93, %s95
      %p99 = scmp.eq.s32.totalorder %s17, 0
      %p100 = por %p98, %p99
      %p101 = scmp.ne.s32.totalorder %s93, %s95
      %p102 = scmp.eq.s32.totalorder %s22, 1
      %p103 = por %p101, %p102
      %p104 = scmp.ne.s32.totalorder %s95, %s96
      %p105 = scmp.eq.s32.totalorder %s22, 0
      %p106 = por %p104, %p105
      %p107 = scmp.ne.s32.totalorder %s95, %s96
      %p108 = scmp.eq.s32.totalorder %s23, 1
      %p109 = por %p107, %p108
      %p111 = scmp.ne.s32.totalorder %s96, %s110
      %p112 = scmp.eq.s32.totalorder %s23, 0
      %p113 = por %p111, %p112
      %s115 = sadd.s32 %s114, 1
      %p118 = scmp.eq.s32.totalorder %s17, 1
      %p119 = scmp.ne.s32.totalorder %s114, %s116
      %p120 = scmp.eq.s32.totalorder %s17, 0
      %p121 = por %p119, %p120
      %p122 = scmp.ne.s32.totalorder %s114, %s116
      %p123 = scmp.eq.s32.totalorder %s22, 1
      %p124 = por %p122, %p123
      %p125 = scmp.ne.s32.totalorder %s116, %s117
      %p126 = scmp.eq.s32.totalorder %s22, 0
      %p127 = por %p125, %p126
      %p128 = scmp.ne.s32.totalorder %s116, %s117
      %p129 = scmp.eq.s32.totalorder %s23, 1
      %p130 = por %p128, %p129
      %p132 = scmp.ne.s32.totalorder %s117, %s131
      %p133 = scmp.eq.s32.totalorder %s23, 0
      %p134 = por %p132, %p133
      %s136 = sadd.s32 %s135, 1
      %p139 = scmp.eq.s32.totalorder %s17, 1
      %p140 = scmp.ne.s32.totalorder %s135, %s137
      %p141 = scmp.eq.s32.totalorder %s17, 0
      %p142 = por %p140, %p141
      %p143 = scmp.ne.s32.totalorder %s135, %s137
      %p144 = scmp.eq.s32.totalorder %s22, 1
      %p145 = por %p143, %p144
      %p146 = scmp.ne.s32.totalorder %s137, %s138
      %p147 = scmp.eq.s32.totalorder %s22, 0
      %p148 = por %p146, %p147
      %p149 = scmp.ne.s32.totalorder %s137, %s138
      %p150 = scmp.eq.s32.totalorder %s23, 1
      %p151 = por %p149, %p150
      %p153 = scmp.ne.s32.totalorder %s138, %s152
      %p154 = scmp.eq.s32.totalorder %s23, 0
      %p155 = por %p153, %p154
      %s157 = sadd.s32 %s156, 1
      %p160 = scmp.eq.s32.totalorder %s17, 1
      %p161 = scmp.ne.s32.totalorder %s156, %s158
      %p162 = scmp.eq.s32.totalorder %s17, 0
      %p163 = por %p161, %p162
      %p164 = scmp.ne.s32.totalorder %s156, %s158
      %p165 = scmp.eq.s32.totalorder %s22, 1
      %p166 = por %p164, %p165
      %p167 = scmp.ne.s32.totalorder %s158, %s159
      %p168 = scmp.eq.s32.totalorder %s22, 0
      %p169 = por %p167, %p168
      %p170 = scmp.ne.s32.totalorder %s158, %s159
      %p171 = scmp.eq.s32.totalorder %s23, 1
      %p172 = por %p170, %p171
      %p174 = scmp.ne.s32.totalorder %s159, %s173
      %p175 = scmp.eq.s32.totalorder %s23, 0
      %p176 = por %p174, %p175
      %s177 = ssub.s32 %s17, %s24
      %p178 = scmp.eq.s32.totalorder %s177, 0
      %s180 = sadd.s32 %s179, 1
      %s181 = scalar_select %p178, %s179, %s180
      %p184 = pneg %p178
      %p185 = scmp.eq.s32.totalorder %s17, 1
      %p186 = por %p184, %p185
      %p187 = scmp.ne.s32.totalorder %s179, %s182
      %p188 = scmp.eq.s32.totalorder %s17, 0
      %p189 = por %p187, %p188
      %p190 = scmp.ne.s32.totalorder %s179, %s182
      %p191 = scmp.eq.s32.totalorder %s22, 1
      %p192 = por %p190, %p191
      %p193 = scmp.ne.s32.totalorder %s182, %s183
      %p194 = scmp.eq.s32.totalorder %s22, 0
      %p195 = por %p193, %p194
      %p196 = scmp.ne.s32.totalorder %s182, %s183
      %p197 = scmp.eq.s32.totalorder %s23, 1
      %p198 = por %p196, %p197
      %p200 = scmp.ne.s32.totalorder %s183, %s199
      %p201 = scmp.eq.s32.totalorder %s23, 0
      %p202 = por %p200, %p201
      %p203 = scmp.le.s32.totalorder 1, %s17
      %p204 = scmp.lt.s32.totalorder %s17, 3
      %p205 = pnand %p203, %p204
      %p206 = pneg %p205
      // Predicated region
      $region9: #{mlp_forward.1} parent=5 // pred_check
        _
      $region10: #{mlp_forward.1} parent=5 // pred_check_branch
        %208 = sbr.rel (%p205) target = $region12
      $region11: #{mlp_forward.1} parent=5 // pred_region
        %s209 = ssub.s32 %s17, 1
        // Predicated region
        $region13: #{mlp_forward.1} parent=11 // pred_check
          %p210 = pneg %p64
        $region14: #{mlp_forward.1} parent=11 // pred_check_branch
          %212 = sbr.rel (%p210) target = $region16
        $region15: #{mlp_forward.1} parent=11 // pred_region
          %s214 = ssub.s32 128, 128
          %215 = vsyncadd [#allocation5], %s214
          %s217 = sshll.u32 %s1, 4
          %s218 = int_to_ptr.vmem [resolvable:$true] %s217
          %220 = dma.vmem_to_smem %s218, 128, [#allocation4], [#allocation5]
        $region16: #{mlp_forward.1} parent=11 // pred_fallthru
          _
        // Predicated region
        $region17: #{mlp_forward.1} parent=11 // pred_check
          %p221 = pneg %p85
        $region18: #{mlp_forward.1} parent=11 // pred_check_branch
          %223 = sbr.rel (%p221) target = $region20
        $region19: #{mlp_forward.1} parent=11 // pred_region
          %s225 = ssub.s32 16, 16
          %226 = vsyncadd [#allocation7], %s225
          %s228 = sshll.u32 %s2, 4
          %s229 = int_to_ptr.vmem [resolvable:$true] %s228
          %231 = dma.vmem_to_smem %s229, 16, [#allocation6], [#allocation7]
        $region20: #{mlp_forward.1} parent=11 // pred_fallthru
          _
        // Predicated region
        $region21: #{mlp_forward.1} parent=11 // pred_check
          %p232 = pneg %p106
        $region22: #{mlp_forward.1} parent=11 // pred_check_branch
          %234 = sbr.rel (%p232) target = $region24
        $region23: #{mlp_forward.1} parent=11 // pred_region
          %s236 = ssub.s32 64, 64
          %237 = vsyncadd [#allocation7], %s236
          %s239 = sshll.u32 %s3, 4
          %s240 = int_to_ptr.vmem [resolvable:$true] %s239
          %242 = dma.vmem_to_smem %s240, 64, [#allocation8], [#allocation7]
        $region24: #{mlp_forward.1} parent=11 // pred_fallthru
          _
        // Predicated region
        $region25: #{mlp_forward.1} parent=11 // pred_check
          %p243 = pneg %p127
        $region26: #{mlp_forward.1} parent=11 // pred_check_branch
          %245 = sbr.rel (%p243) target = $region28
        $region27: #{mlp_forward.1} parent=11 // pred_region
          %s247 = ssub.s32 16, 16
          %248 = vsyncadd [#allocation10], %s247
          %s250 = sshll.u32 %s4, 4
          %s251 = int_to_ptr.vmem [resolvable:$true] %s250
          %253 = dma.vmem_to_smem %s251, 16, [#allocation9], [#allocation10]
        $region28: #{mlp_forward.1} parent=11 // pred_fallthru
          _
        // Predicated region
        $region29: #{mlp_forward.1} parent=11 // pred_check
          %p254 = pneg %p148
        $region30: #{mlp_forward.1} parent=11 // pred_check_branch
          %256 = sbr.rel (%p254) target = $region32
        $region31: #{mlp_forward.1} parent=11 // pred_region
          %s258 = ssub.s32 16, 16
          %259 = vsyncadd [#allocation10], %s258
          %s261 = sshll.u32 %s5, 4
          %s262 = int_to_ptr.vmem [resolvable:$true] %s261
          %264 = dma.vmem_to_smem %s262, 16, [#allocation11], [#allocation10]
        $region32: #{mlp_forward.1} parent=11 // pred_fallthru
          _
        // Predicated region
        $region33: #{mlp_forward.1} parent=11 // pred_check
          %p265 = pneg %p169
        $region34: #{mlp_forward.1} parent=11 // pred_check_branch
          %267 = sbr.rel (%p265) target = $region36
        $region35: #{mlp_forward.1} parent=11 // pred_region
          _
        $region36: #{mlp_forward.1} parent=11 // pred_fallthru
          _
      $region12: #{mlp_forward.1} parent=5 // pred_fallthru
        _
      %p268 = scmp.lt.s32.totalorder %s17, 2
      // Predicated region
      $region37: #{mlp_forward.1} parent=5 // pred_check
        %p269 = pneg %p268
      $region38: #{mlp_forward.1} parent=5 // pred_check_branch
        %271 = sbr.rel (%p269) target = $region40
      $region39: #{mlp_forward.1} parent=5 // pred_region
        // Predicated region
        $region41: #{mlp_forward.1} parent=39 // pred_check
          %p272 = pneg %p37
        $region42: #{mlp_forward.1} parent=39 // pred_check_branch
          %274 = sbr.rel (%p272) target = $region44
        $region43: #{mlp_forward.1} parent=39 // pred_region
          %s275 = sand.u32 %s27, 1
          %s276 = sand.u32 %s27, 1
          %s277 = smul.addr %s276, 256
          %s278 = scalar_lea.vmem [#allocation3], %s277
          %s279 = smul.u32 4, %s17
          %s280 = smul.addr %s279, 8
          %s281 = scalar_lea.vmem %s0, %s280
          // Predicated region
          $region45: #{mlp_forward.1} parent=43 // pred_check
            _
          $region46: #{mlp_forward.1} parent=43 // pred_check_branch
            %283 = sbr.rel (0) target = $region48
          $region47: #{mlp_forward.1} parent=43 // pred_region
            // Predicated region
            $region49: #{mlp_forward.1} parent=47 // pred_check
              _
            $region50: #{mlp_forward.1} parent=47 // pred_check_branch
              %285 = sbr.rel (0) target = $region52
            $region51: #{mlp_forward.1} parent=47 // pred_region
              loop: start=0, step=1, limit=1
              $region53: #{mlp_forward.1} parent=51 // loop_pre_header
                _
              $region54: #{mlp_forward.1} parent=51 // loop_header
                %s287 = sphi 0, %s291
                %p288 = scmp.ge.s32.totalorder %s287, 1
                %s292 = sphi %s281, %s281
                %s293 = sphi %s278, %s278
              $region55: #{mlp_forward.1} parent=51 // loop_header_branch
                %290 = sbr.rel (%p288) target = $region59
              $region56: #{mlp_forward.1} parent=51 // loop_body
                %v294 = vld [vmem:[%s292] sm:$0xff]
                %295 = vst [vmem:[%s293] sm:$0xff] %v294
                %v296 = vld [vmem:[%s292 + $0x8] sm:$0xff]
                %297 = vst [vmem:[%s293 + $0x8] sm:$0xff] %v296
                %v298 = vld [vmem:[%s292 + $0x10] sm:$0xff]
                %299 = vst [vmem:[%s293 + $0x10] sm:$0xff] %v298
                %v300 = vld [vmem:[%s292 + $0x18] sm:$0xff]
                %301 = vst [vmem:[%s293 + $0x18] sm:$0xff] %v300
                %v302 = vld [vmem:[%s292 + $0x40] sm:$0xff]
                %303 = vst [vmem:[%s293 + $0x20] sm:$0xff] %v302
                %v304 = vld [vmem:[%s292 + $0x48] sm:$0xff]
                %305 = vst [vmem:[%s293 + $0x28] sm:$0xff] %v304
                %v306 = vld [vmem:[%s292 + $0x50] sm:$0xff]
                %307 = vst [vmem:[%s293 + $0x30] sm:$0xff] %v306
                %v308 = vld [vmem:[%s292 + $0x58] sm:$0xff]
                %309 = vst [vmem:[%s293 + $0x38] sm:$0xff] %v308
                %v310 = vld [vmem:[%s292 + $0x80] sm:$0xff]
                %311 = vst [vmem:[%s293 + $0x40] sm:$0xff] %v310
                %v312 = vld [vmem:[%s292 + $0x88] sm:$0xff]
                %313 = vst [vmem:[%s293 + $0x48] sm:$0xff] %v312
                %v314 = vld [vmem:[%s292 + $0x90] sm:$0xff]
                %315 = vst [vmem:[%s293 + $0x50] sm:$0xff] %v314
                %v316 = vld [vmem:[%s292 + $0x98] sm:$0xff]
                %317 = vst [vmem:[%s293 + $0x58] sm:$0xff] %v316
                %v318 = vld [vmem:[%s292 + $0xc0] sm:$0xff]
                %319 = vst [vmem:[%s293 + $0x60] sm:$0xff] %v318
                %v320 = vld [vmem:[%s292 + $0xc8] sm:$0xff]
                %321 = vst [vmem:[%s293 + $0x68] sm:$0xff] %v320
                %v322 = vld [vmem:[%s292 + $0xd0] sm:$0xff]
                %323 = vst [vmem:[%s293 + $0x70] sm:$0xff] %v322
                %v324 = vld [vmem:[%s292 + $0xd8] sm:$0xff]
                %325 = vst [vmem:[%s293 + $0x78] sm:$0xff] %v324
                %v326 = vld [vmem:[%s292 + $0x100] sm:$0xff]
                %327 = vst [vmem:[%s293 + $0x80] sm:$0xff] %v326
                %v328 = vld [vmem:[%s292 + $0x108] sm:$0xff]
                %329 = vst [vmem:[%s293 + $0x88] sm:$0xff] %v328
                %v330 = vld [vmem:[%s292 + $0x110] sm:$0xff]
                %331 = vst [vmem:[%s293 + $0x90] sm:$0xff] %v330
                %v332 = vld [vmem:[%s292 + $0x118] sm:$0xff]
                %333 = vst [vmem:[%s293 + $0x98] sm:$0xff] %v332
                %v334 = vld [vmem:[%s292 + $0x140] sm:$0xff]
                %335 = vst [vmem:[%s293 + $0xa0] sm:$0xff] %v334
                %v336 = vld [vmem:[%s292 + $0x148] sm:$0xff]
                %337 = vst [vmem:[%s293 + $0xa8] sm:$0xff] %v336
                %v338 = vld [vmem:[%s292 + $0x150] sm:$0xff]
                %339 = vst [vmem:[%s293 + $0xb0] sm:$0xff] %v338
                %v340 = vld [vmem:[%s292 + $0x158] sm:$0xff]
                %341 = vst [vmem:[%s293 + $0xb8] sm:$0xff] %v340
                %v342 = vld [vmem:[%s292 + $0x180] sm:$0xff]
                %343 = vst [vmem:[%s293 + $0xc0] sm:$0xff] %v342
                %v344 = vld [vmem:[%s292 + $0x188] sm:$0xff]
                %345 = vst [vmem:[%s293 + $0xc8] sm:$0xff] %v344
                %v346 = vld [vmem:[%s292 + $0x190] sm:$0xff]
                %347 = vst [vmem:[%s293 + $0xd0] sm:$0xff] %v346
                %v348 = vld [vmem:[%s292 + $0x198] sm:$0xff]
                %349 = vst [vmem:[%s293 + $0xd8] sm:$0xff] %v348
                %v350 = vld [vmem:[%s292 + $0x1c0] sm:$0xff]
                %351 = vst [vmem:[%s293 + $0xe0] sm:$0xff] %v350
                %v352 = vld [vmem:[%s292 + $0x1c8] sm:$0xff]
                %353 = vst [vmem:[%s293 + $0xe8] sm:$0xff] %v352
                %v354 = vld [vmem:[%s292 + $0x1d0] sm:$0xff]
                %355 = vst [vmem:[%s293 + $0xf0] sm:$0xff] %v354
                %v356 = vld [vmem:[%s292 + $0x1d8] sm:$0xff]
                %357 = vst [vmem:[%s293 + $0xf8] sm:$0xff] %v356
              $region57: #{mlp_forward.1} parent=51 // loop_footer
                %s291 = sadd.s32 1, %s287
              $region58: #{mlp_forward.1} parent=51 // loop_footer_branch
                %286 = sbr.rel target = $region54
              $region59: #{mlp_forward.1} parent=51 // loop_exit
                _
            $region52: #{mlp_forward.1} parent=47 // pred_fallthru
              _
            // Predicated region
            $region60: #{mlp_forward.1} parent=47 // pred_check
              _
            $region61: #{mlp_forward.1} parent=47 // pred_check_branch
              %359 = sbr.rel target = $region63
            $region62: #{mlp_forward.1} parent=47 // pred_region
              _
            $region63: #{mlp_forward.1} parent=47 // pred_fallthru
              _
          $region48: #{mlp_forward.1} parent=43 // pred_fallthru
            _
          %360 = vnop
        $region44: #{mlp_forward.1} parent=39 // pred_fallthru
          _
      $region40: #{mlp_forward.1} parent=5 // pred_fallthru
        _
      %p361 = scmp.le.s32.totalorder 1, %s17
      %p362 = scmp.lt.s32.totalorder %s17, 3
      %p363 = pnand %p361, %p362
      %p364 = pneg %p363
      // Predicated region
      $region64: #{mlp_forward.1} parent=5 // pred_check
        _
      $region65: #{mlp_forward.1} parent=5 // pred_check_branch
        %366 = sbr.rel (%p363) target = $region67
      $region66: #{mlp_forward.1} parent=5 // pred_region
        %s367 = ssub.s32 %s17, 1
        %s368 = sand.u32 %s30, 1
        %s369 = sand.u32 %s30, 1
        %s370 = smul.addr %s369, 256
        %s371 = scalar_lea.vmem [#allocation3], %s370
        // Predicated region
        $region68: #{mlp_forward.1} parent=66 // pred_check
          %p372 = pneg %p43
        $region69: #{mlp_forward.1} parent=66 // pred_check_branch
          %374 = sbr.rel (%p372) target = $region71
        $region70: #{mlp_forward.1} parent=66 // pred_region
          _
        $region71: #{mlp_forward.1} parent=66 // pred_fallthru
          _
        // Predicated region
        $region72: #{mlp_forward.1} parent=66 // pred_check
          %p375 = pneg %p64
        $region73: #{mlp_forward.1} parent=66 // pred_check_branch
          %377 = sbr.rel (%p375) target = $region75
        $region74: #{mlp_forward.1} parent=66 // pred_region
          %378 = dma.done [#allocation5], 128
        $region75: #{mlp_forward.1} parent=66 // pred_fallthru
          _
        // Predicated region
        $region76: #{mlp_forward.1} parent=66 // pred_check
          %p379 = pneg %p85
        $region77: #{mlp_forward.1} parent=66 // pred_check_branch
          %381 = sbr.rel (%p379) target = $region79
        $region78: #{mlp_forward.1} parent=66 // pred_region
          %382 = dma.done [#allocation7], 16
        $region79: #{mlp_forward.1} parent=66 // pred_fallthru
          _
        // Predicated region
        $region80: #{mlp_forward.1} parent=66 // pred_check
          %p383 = pneg %p106
        $region81: #{mlp_forward.1} parent=66 // pred_check_branch
          %385 = sbr.rel (%p383) target = $region83
        $region82: #{mlp_forward.1} parent=66 // pred_region
          %386 = dma.done [#allocation7], 64
        $region83: #{mlp_forward.1} parent=66 // pred_fallthru
          _
        // Predicated region
        $region84: #{mlp_forward.1} parent=66 // pred_check
          %p387 = pneg %p127
        $region85: #{mlp_forward.1} parent=66 // pred_check_branch
          %389 = sbr.rel (%p387) target = $region87
        $region86: #{mlp_forward.1} parent=66 // pred_region
          %390 = dma.done [#allocation10], 16
        $region87: #{mlp_forward.1} parent=66 // pred_fallthru
          _
        // Predicated region
        $region88: #{mlp_forward.1} parent=66 // pred_check
          %p391 = pneg %p148
        $region89: #{mlp_forward.1} parent=66 // pred_check_branch
          %393 = sbr.rel (%p391) target = $region91
        $region90: #{mlp_forward.1} parent=66 // pred_region
          %394 = dma.done [#allocation10], 16
        $region91: #{mlp_forward.1} parent=66 // pred_fallthru
          _
        %395 = sfence
        %s396 = sand.u32 %s30, 1
        %s397 = sand.u32 %s30, 1
        %s398 = smul.addr %s397, 256
        %s399 = scalar_lea.vmem [#allocation3], %s398
        %p400 = pneg %p43
        %p401 = pneg %p40
        %p402 = pneg %p64
        %p403 = pneg %p61
        %p404 = pneg %p85
        %p405 = pneg %p82
        %p406 = pneg %p106
        %p407 = pneg %p103
        %p408 = pneg %p127
        %p409 = pneg %p124
        %p410 = pneg %p148
        %p411 = pneg %p145
        %p412 = pneg %p169
        %p413 = pneg %p166
        %p414 = pneg %p195
        %p415 = pneg %p192
        %s416 = smul.u32 4, %s22
        %p417 = scmp.lt.s32.totalorder %s416, 7
        %s418 = scalar_select %p417, %s416, 7
        %s419 = smul.addr %s418, 8
        %s420 = scalar_lea.vmem %s7, %s419
        %s421 = smul.u32 4, %s22
        %s422 = smul.u32 4, %s22
        %p423 = scmp.lt.s32.totalorder %s422, 7
        %s424 = scalar_select %p423, %s422, 7
        %s425 = smul.addr %s424, 8
        %s426 = scalar_lea.vmem %s7, %s425
        %s427 = smul.u32 4, %s22
        %v428 = vld [vmem:[%s371] sm:$0xff]
        %v429 = vld [vmem:[%s371 + $0x8] sm:$0xff]
        %s430 = scalar_lea.vmem %s371, 32 [#allocation3]
        %v431 = vld [vmem:[%s430] sm:$0xff]
        %v432 = vld [vmem:[%s430 + $0x8] sm:$0xff]
        %s433 = scalar_lea.vmem %s371, 64 [#allocation3]
        %v434 = vld [vmem:[%s433] sm:$0xff]
        %v435 = vld [vmem:[%s433 + $0x8] sm:$0xff]
        %s436 = scalar_lea.vmem %s371, 96 [#allocation3]
        %v437 = vld [vmem:[%s436] sm:$0xff]
        %v438 = vld [vmem:[%s436 + $0x8] sm:$0xff]
        %s439 = scalar_lea.vmem %s371, 128 [#allocation3]
        %v440 = vld [vmem:[%s439] sm:$0xff]
        %v441 = vld [vmem:[%s439 + $0x8] sm:$0xff]
        %s442 = scalar_lea.vmem %s371, 160 [#allocation3]
        %v443 = vld [vmem:[%s442] sm:$0xff]
        %v444 = vld [vmem:[%s442 + $0x8] sm:$0xff]
        %s445 = scalar_lea.vmem %s371, 192 [#allocation3]
        %v446 = vld [vmem:[%s445] sm:$0xff]
        %v447 = vld [vmem:[%s445 + $0x8] sm:$0xff]
        %s448 = scalar_lea.vmem %s371, 224 [#allocation3]
        %v449 = vld [vmem:[%s448] sm:$0xff]
        %v450 = vld [vmem:[%s448 + $0x8] sm:$0xff]
        %s451 = sld [smem:[#allocation4]]
        %v452 = vstv %s451
        %v453 = vmul.f32 %v428, %v452
        %v454 = vmul.f32 %v429, %v452
        %s455 = sld [smem:[#allocation4 + $0x1]]
        %v456 = vstv %s455
        %v457 = vmul.f32 %v431, %v456
        %v458 = vmul.f32 %v432, %v456
        %v459 = vadd.f32 %v453, %v457
        %v460 = vadd.f32 %v454, %v458
        %s461 = sld [smem:[#allocation4 + $0x2]]
        %v462 = vstv %s461
        %v463 = vmul.f32 %v434, %v462
        %v464 = vmul.f32 %v435, %v462
        %v465 = vadd.f32 %v459, %v463
        %v466 = vadd.f32 %v460, %v464
        %s467 = sld [smem:[#allocation4 + $0x3]]
        %v468 = vstv %s467
        %v469 = vmul.f32 %v437, %v468
        %v470 = vmul.f32 %v438, %v468
        %v471 = vadd.f32 %v465, %v469
        %v472 = vadd.f32 %v466, %v470
        %s473 = sld [smem:[#allocation4 + $0x4]]
        %v474 = vstv %s473
        %v475 = vmul.f32 %v440, %v474
        %v476 = vmul.f32 %v441, %v474
        %v477 = vadd.f32 %v471, %v475
        %v478 = vadd.f32 %v472, %v476
        %s479 = sld [smem:[#allocation4 + $0x5]]
        %v480 = vstv %s479
        %v481 = vmul.f32 %v443, %v480
        %v482 = vmul.f32 %v444, %v480
        %v483 = vadd.f32 %v477, %v481
        %v484 = vadd.f32 %v478, %v482
        %s485 = sld [smem:[#allocation4 + $0x6]]
        %v486 = vstv %s485
        %v487 = vmul.f32 %v446, %v486
        %v488 = vmul.f32 %v447, %v486
        %v489 = vadd.f32 %v483, %v487
        %v490 = vadd.f32 %v484, %v488
        %s491 = sld [smem:[#allocation4 + $0x7]]
        %v492 = vstv %s491
        %v493 = vmul.f32 %v449, %v492
        %v494 = vmul.f32 %v450, %v492
        %v495 = vadd.f32 %v489, %v493
        %v496 = vadd.f32 %v490, %v494
        %s497 = sld [smem:[#allocation6]]
        %v498 = vstv %s497
        %v499 = vadd.f32 %v495, %v498
        %v500 = vadd.f32 %v496, %v498
        %v501 = vtanh.pop %v499
        %v502 = vtanh.pop %v500
        %s503 = sld [smem:[#allocation4 + $0x80]]
        %v504 = vstv %s503
        %v505 = vmul.f32 %v428, %v504
        %v506 = vmul.f32 %v429, %v504
        %s507 = sld [smem:[#allocation4 + $0x81]]
        %v508 = vstv %s507
        %v509 = vmul.f32 %v431, %v508
        %v510 = vmul.f32 %v432, %v508
        %v511 = vadd.f32 %v505, %v509
        %v512 = vadd.f32 %v506, %v510
        %s513 = sld [smem:[#allocation4 + $0x82]]
        %v514 = vstv %s513
        %v515 = vmul.f32 %v434, %v514
        %v516 = vmul.f32 %v435, %v514
        %v517 = vadd.f32 %v511, %v515
        %v518 = vadd.f32 %v512, %v516
        %s519 = sld [smem:[#allocation4 + $0x83]]
        %v520 = vstv %s519
        %v521 = vmul.f32 %v437, %v520
        %v522 = vmul.f32 %v438, %v520
        %v523 = vadd.f32 %v517, %v521
        %v524 = vadd.f32 %v518, %v522
        %s525 = sld [smem:[#allocation4 + $0x84]]
        %v526 = vstv %s525
        %v527 = vmul.f32 %v440, %v526
        %v528 = vmul.f32 %v441, %v526
        %v529 = vadd.f32 %v523, %v527
        %v530 = vadd.f32 %v524, %v528
        %s531 = sld [smem:[#allocation4 + $0x85]]
        %v532 = vstv %s531
        %v533 = vmul.f32 %v443, %v532
        %v534 = vmul.f32 %v444, %v532
        %v535 = vadd.f32 %v529, %v533
        %v536 = vadd.f32 %v530, %v534
        %s537 = sld [smem:[#allocation4 + $0x86]]
        %v538 = vstv %s537
        %v539 = vmul.f32 %v446, %v538
        %v540 = vmul.f32 %v447, %v538
        %v541 = vadd.f32 %v535, %v539
        %v542 = vadd.f32 %v536, %v540
        %s543 = sld [smem:[#allocation4 + $0x87]]
        %v544 = vstv %s543
        %v545 = vmul.f32 %v449, %v544
        %v546 = vmul.f32 %v450, %v544
        %v547 = vadd.f32 %v541, %v545
        %v548 = vadd.f32 %v542, %v546
        %s549 = sld [smem:[#allocation6 + $0x1]]
        %v550 = vstv %s549
        %v551 = vadd.f32 %v547, %v550
        %v552 = vadd.f32 %v548, %v550
        %v553 = vtanh.pop %v551
        %v554 = vtanh.pop %v552
        %s555 = sld [smem:[#allocation4 + $0x100]]
        %v556 = vstv %s555
        %v557 = vmul.f32 %v428, %v556
        %v558 = vmul.f32 %v429, %v556
        %s559 = sld [smem:[#allocation4 + $0x101]]
        %v560 = vstv %s559
        %v561 = vmul.f32 %v431, %v560
        %v562 = vmul.f32 %v432, %v560
        %v563 = vadd.f32 %v557, %v561
        %v564 = vadd.f32 %v558, %v562
        %s565 = sld [smem:[#allocation4 + $0x102]]
        %v566 = vstv %s565
        %v567 = vmul.f32 %v434, %v566
        %v568 = vmul.f32 %v435, %v566
        %v569 = vadd.f32 %v563, %v567
        %v570 = vadd.f32 %v564, %v568
        %s571 = sld [smem:[#allocation4 + $0x103]]
        %v572 = vstv %s571
        %v573 = vmul.f32 %v437, %v572
        %v574 = vmul.f32 %v438, %v572
        %v575 = vadd.f32 %v569, %v573
        %v576 = vadd.f32 %v570, %v574
        %s577 = sld [smem:[#allocation4 + $0x104]]
        %v578 = vstv %s577
        %v579 = vmul.f32 %v440, %v578
        %v580 = vmul.f32 %v441, %v578
        %v581 = vadd.f32 %v575, %v579
        %v582 = vadd.f32 %v576, %v580
        %s583 = sld [smem:[#allocation4 + $0x105]]
        %v584 = vstv %s583
        %v585 = vmul.f32 %v443, %v584
        %v586 = vmul.f32 %v444, %v584
        %v587 = vadd.f32 %v581, %v585
        %v588 = vadd.f32 %v582, %v586
        %s589 = sld [smem:[#allocation4 + $0x106]]
        %v590 = vstv %s589
        %v591 = vmul.f32 %v446, %v590
        %v592 = vmul.f32 %v447, %v590
        %v593 = vadd.f32 %v587, %v591
        %v594 = vadd.f32 %v588, %v592
        %s595 = sld [smem:[#allocation4 + $0x107]]
        %v596 = vstv %s595
        %v597 = vmul.f32 %v449, %v596
        %v598 = vmul.f32 %v450, %v596
        %v599 = vadd.f32 %v593, %v597
        %v600 = vadd.f32 %v594, %v598
        %s601 = sld [smem:[#allocation6 + $0x2]]
        %v602 = vstv %s601
        %v603 = vadd.f32 %v599, %v602
        %v604 = vadd.f32 %v600, %v602
        %v605 = vtanh.pop %v603
        %v606 = vtanh.pop %v604
        %s607 = sld [smem:[#allocation4 + $0x180]]
        %v608 = vstv %s607
        %v609 = vmul.f32 %v428, %v608
        %v610 = vmul.f32 %v429, %v608
        %s611 = sld [smem:[#allocation4 + $0x181]]
        %v612 = vstv %s611
        %v613 = vmul.f32 %v431, %v612
        %v614 = vmul.f32 %v432, %v612
        %v615 = vadd.f32 %v609, %v613
        %v616 = vadd.f32 %v610, %v614
        %s617 = sld [smem:[#allocation4 + $0x182]]
        %v618 = vstv %s617
        %v619 = vmul.f32 %v434, %v618
        %v620 = vmul.f32 %v435, %v618
        %v621 = vadd.f32 %v615, %v619
        %v622 = vadd.f32 %v616, %v620
        %s623 = sld [smem:[#allocation4 + $0x183]]
        %v624 = vstv %s623
        %v625 = vmul.f32 %v437, %v624
        %v626 = vmul.f32 %v438, %v624
        %v627 = vadd.f32 %v621, %v625
        %v628 = vadd.f32 %v622, %v626
        %s629 = sld [smem:[#allocation4 + $0x184]]
        %v630 = vstv %s629
        %v631 = vmul.f32 %v440, %v630
        %v632 = vmul.f32 %v441, %v630
        %v633 = vadd.f32 %v627, %v631
        %v634 = vadd.f32 %v628, %v632
        %s635 = sld [smem:[#allocation4 + $0x185]]
        %v636 = vstv %s635
        %v637 = vmul.f32 %v443, %v636
        %v638 = vmul.f32 %v444, %v636
        %v639 = vadd.f32 %v633, %v637
        %v640 = vadd.f32 %v634, %v638
        %s641 = sld [smem:[#allocation4 + $0x186]]
        %v642 = vstv %s641
        %v643 = vmul.f32 %v446, %v642
        %v644 = vmul.f32 %v447, %v642
        %v645 = vadd.f32 %v639, %v643
        %v646 = vadd.f32 %v640, %v644
        %s647 = sld [smem:[#allocation4 + $0x187]]
        %v648 = vstv %s647
        %v649 = vmul.f32 %v449, %v648
        %v650 = vmul.f32 %v450, %v648
        %v651 = vadd.f32 %v645, %v649
        %v652 = vadd.f32 %v646, %v650
        %s653 = sld [smem:[#allocation6 + $0x3]]
        %v654 = vstv %s653
        %v655 = vadd.f32 %v651, %v654
        %v656 = vadd.f32 %v652, %v654
        %v657 = vtanh.pop %v655
        %v658 = vtanh.pop %v656
        %s659 = sld [smem:[#allocation4 + $0x200]]
        %v660 = vstv %s659
        %v661 = vmul.f32 %v428, %v660
        %v662 = vmul.f32 %v429, %v660
        %s663 = sld [smem:[#allocation4 + $0x201]]
        %v664 = vstv %s663
        %v665 = vmul.f32 %v431, %v664
        %v666 = vmul.f32 %v432, %v664
        %v667 = vadd.f32 %v661, %v665
        %v668 = vadd.f32 %v662, %v666
        %s669 = sld [smem:[#allocation4 + $0x202]]
        %v670 = vstv %s669
        %v671 = vmul.f32 %v434, %v670
        %v672 = vmul.f32 %v435, %v670
        %v673 = vadd.f32 %v667, %v671
        %v674 = vadd.f32 %v668, %v672
        %s675 = sld [smem:[#allocation4 + $0x203]]
        %v676 = vstv %s675
        %v677 = vmul.f32 %v437, %v676
        %v678 = vmul.f32 %v438, %v676
        %v679 = vadd.f32 %v673, %v677
        %v680 = vadd.f32 %v674, %v678
        %s681 = sld [smem:[#allocation4 + $0x204]]
        %v682 = vstv %s681
        %v683 = vmul.f32 %v440, %v682
        %v684 = vmul.f32 %v441, %v682
        %v685 = vadd.f32 %v679, %v683
        %v686 = vadd.f32 %v680, %v684
        %s687 = sld [smem:[#allocation4 + $0x205]]
        %v688 = vstv %s687
        %v689 = vmul.f32 %v443, %v688
        %v690 = vmul.f32 %v444, %v688
        %v691 = vadd.f32 %v685, %v689
        %v692 = vadd.f32 %v686, %v690
        %s693 = sld [smem:[#allocation4 + $0x206]]
        %v694 = vstv %s693
        %v695 = vmul.f32 %v446, %v694
        %v696 = vmul.f32 %v447, %v694
        %v697 = vadd.f32 %v691, %v695
        %v698 = vadd.f32 %v692, %v696
        %s699 = sld [smem:[#allocation4 + $0x207]]
        %v700 = vstv %s699
        %v701 = vmul.f32 %v449, %v700
        %v702 = vmul.f32 %v450, %v700
        %v703 = vadd.f32 %v697, %v701
        %v704 = vadd.f32 %v698, %v702
        %s705 = sld [smem:[#allocation6 + $0x4]]
        %v706 = vstv %s705
        %v707 = vadd.f32 %v703, %v706
        %v708 = vadd.f32 %v704, %v706
        %v709 = vtanh.pop %v707
        %v710 = vtanh.pop %v708
        %s711 = sld [smem:[#allocation4 + $0x280]]
        %v712 = vstv %s711
        %v713 = vmul.f32 %v428, %v712
        %v714 = vmul.f32 %v429, %v712
        %s715 = sld [smem:[#allocation4 + $0x281]]
        %v716 = vstv %s715
        %v717 = vmul.f32 %v431, %v716
        %v718 = vmul.f32 %v432, %v716
        %v719 = vadd.f32 %v713, %v717
        %v720 = vadd.f32 %v714, %v718
        %s721 = sld [smem:[#allocation4 + $0x282]]
        %v722 = vstv %s721
        %v723 = vmul.f32 %v434, %v722
        %v724 = vmul.f32 %v435, %v722
        %v725 = vadd.f32 %v719, %v723
        %v726 = vadd.f32 %v720, %v724
        %s727 = sld [smem:[#allocation4 + $0x283]]
        %v728 = vstv %s727
        %v729 = vmul.f32 %v437, %v728
        %v730 = vmul.f32 %v438, %v728
        %v731 = vadd.f32 %v725, %v729
        %v732 = vadd.f32 %v726, %v730
        %s733 = sld [smem:[#allocation4 + $0x284]]
        %v734 = vstv %s733
        %v735 = vmul.f32 %v440, %v734
        %v736 = vmul.f32 %v441, %v734
        %v737 = vadd.f32 %v731, %v735
        %v738 = vadd.f32 %v732, %v736
        %s739 = sld [smem:[#allocation4 + $0x285]]
        %v740 = vstv %s739
        %v741 = vmul.f32 %v443, %v740
        %v742 = vmul.f32 %v444, %v740
        %v743 = vadd.f32 %v737, %v741
        %v744 = vadd.f32 %v738, %v742
        %s745 = sld [smem:[#allocation4 + $0x286]]
        %v746 = vstv %s745
        %v747 = vmul.f32 %v446, %v746
        %v748 = vmul.f32 %v447, %v746
        %v749 = vadd.f32 %v743, %v747
        %v750 = vadd.f32 %v744, %v748
        %s751 = sld [smem:[#allocation4 + $0x287]]
        %v752 = vstv %s751
        %v753 = vmul.f32 %v449, %v752
        %v754 = vmul.f32 %v450, %v752
        %v755 = vadd.f32 %v749, %v753
        %v756 = vadd.f32 %v750, %v754
        %s757 = sld [smem:[#allocation6 + $0x5]]
        %v758 = vstv %s757
        %v759 = vadd.f32 %v755, %v758
        %v760 = vadd.f32 %v756, %v758
        %v761 = vtanh.pop %v759
        %v762 = vtanh.pop %v760
        %s763 = sld [smem:[#allocation8]]
        %v764 = vstv %s763
        %v765 = vmul.f32 %v501, %v764
        %v766 = vmul.f32 %v502, %v764
        %s767 = sld [smem:[#allocation8 + $0x1]]
        %v768 = vstv %s767
        %v769 = vmul.f32 %v553, %v768
        %v770 = vmul.f32 %v554, %v768
        %v771 = vadd.f32 %v765, %v769
        %v772 = vadd.f32 %v766, %v770
        %s773 = sld [smem:[#allocation8 + $0x2]]
        %v774 = vstv %s773
        %v775 = vmul.f32 %v605, %v774
        %v776 = vmul.f32 %v606, %v774
        %v777 = vadd.f32 %v771, %v775
        %v778 = vadd.f32 %v772, %v776
        %s779 = sld [smem:[#allocation8 + $0x3]]
        %v780 = vstv %s779
        %v781 = vmul.f32 %v657, %v780
        %v782 = vmul.f32 %v658, %v780
        %v783 = vadd.f32 %v777, %v781
        %v784 = vadd.f32 %v778, %v782
        %s785 = sld [smem:[#allocation8 + $0x4]]
        %v786 = vstv %s785
        %v787 = vmul.f32 %v709, %v786
        %v788 = vmul.f32 %v710, %v786
        %v789 = vadd.f32 %v783, %v787
        %v790 = vadd.f32 %v784, %v788
        %s791 = sld [smem:[#allocation8 + $0x5]]
        %v792 = vstv %s791
        %v793 = vmul.f32 %v761, %v792
        %v794 = vmul.f32 %v762, %v792
        %v795 = vadd.f32 %v789, %v793
        %v796 = vadd.f32 %v790, %v794
        %s797 = sld [smem:[#allocation9]]
        %v798 = vstv %s797
        %v799 = vadd.f32 %v795, %v798
        %v800 = vadd.f32 %v796, %v798
        %v801 = vtanh.pop %v799
        %v802 = vtanh.pop %v800
        %s803 = sld [smem:[#allocation8 + $0x80]]
        %v804 = vstv %s803
        %v805 = vmul.f32 %v501, %v804
        %v806 = vmul.f32 %v502, %v804
        %s807 = sld [smem:[#allocation8 + $0x81]]
        %v808 = vstv %s807
        %v809 = vmul.f32 %v553, %v808
        %v810 = vmul.f32 %v554, %v808
        %v811 = vadd.f32 %v805, %v809
        %v812 = vadd.f32 %v806, %v810
        %s813 = sld [smem:[#allocation8 + $0x82]]
        %v814 = vstv %s813
        %v815 = vmul.f32 %v605, %v814
        %v816 = vmul.f32 %v606, %v814
        %v817 = vadd.f32 %v811, %v815
        %v818 = vadd.f32 %v812, %v816
        %s819 = sld [smem:[#allocation8 + $0x83]]
        %v820 = vstv %s819
        %v821 = vmul.f32 %v657, %v820
        %v822 = vmul.f32 %v658, %v820
        %v823 = vadd.f32 %v817, %v821
        %v824 = vadd.f32 %v818, %v822
        %s825 = sld [smem:[#allocation8 + $0x84]]
        %v826 = vstv %s825
        %v827 = vmul.f32 %v709, %v826
        %v828 = vmul.f32 %v710, %v826
        %v829 = vadd.f32 %v823, %v827
        %v830 = vadd.f32 %v824, %v828
        %s831 = sld [smem:[#allocation8 + $0x85]]
        %v832 = vstv %s831
        %v833 = vmul.f32 %v761, %v832
        %v834 = vmul.f32 %v762, %v832
        %v835 = vadd.f32 %v829, %v833
        %v836 = vadd.f32 %v830, %v834
        %s837 = sld [smem:[#allocation9 + $0x1]]
        %v838 = vstv %s837
        %v839 = vadd.f32 %v835, %v838
        %v840 = vadd.f32 %v836, %v838
        %v841 = vtanh.pop %v839
        %v842 = vtanh.pop %v840
        %s843 = sld [smem:[#allocation8 + $0x100]]
        %v844 = vstv %s843
        %v845 = vmul.f32 %v501, %v844
        %v846 = vmul.f32 %v502, %v844
        %s847 = sld [smem:[#allocation8 + $0x101]]
        %v848 = vstv %s847
        %v849 = vmul.f32 %v553, %v848
        %v850 = vmul.f32 %v554, %v848
        %v851 = vadd.f32 %v845, %v849
        %v852 = vadd.f32 %v846, %v850
        %s853 = sld [smem:[#allocation8 + $0x102]]
        %v854 = vstv %s853
        %v855 = vmul.f32 %v605, %v854
        %v856 = vmul.f32 %v606, %v854
        %v857 = vadd.f32 %v851, %v855
        %v858 = vadd.f32 %v852, %v856
        %s859 = sld [smem:[#allocation8 + $0x103]]
        %v860 = vstv %s859
        %v861 = vmul.f32 %v657, %v860
        %v862 = vmul.f32 %v658, %v860
        %v863 = vadd.f32 %v857, %v861
        %v864 = vadd.f32 %v858, %v862
        %s865 = sld [smem:[#allocation8 + $0x104]]
        %v866 = vstv %s865
        %v867 = vmul.f32 %v709, %v866
        %v868 = vmul.f32 %v710, %v866
        %v869 = vadd.f32 %v863, %v867
        %v870 = vadd.f32 %v864, %v868
        %s871 = sld [smem:[#allocation8 + $0x105]]
        %v872 = vstv %s871
        %v873 = vmul.f32 %v761, %v872
        %v874 = vmul.f32 %v762, %v872
        %v875 = vadd.f32 %v869, %v873
        %v876 = vadd.f32 %v870, %v874
        %s877 = sld [smem:[#allocation9 + $0x2]]
        %v878 = vstv %s877
        %v879 = vadd.f32 %v875, %v878
        %v880 = vadd.f32 %v876, %v878
        %v881 = vtanh.pop %v879
        %v882 = vtanh.pop %v880
        %s883 = sld [smem:[#allocation8 + $0x180]]
        %v884 = vstv %s883
        %v885 = vmul.f32 %v501, %v884
        %v886 = vmul.f32 %v502, %v884
        %s887 = sld [smem:[#allocation8 + $0x181]]
        %v888 = vstv %s887
        %v889 = vmul.f32 %v553, %v888
        %v890 = vmul.f32 %v554, %v888
        %v891 = vadd.f32 %v885, %v889
        %v892 = vadd.f32 %v886, %v890
        %s893 = sld [smem:[#allocation8 + $0x182]]
        %v894 = vstv %s893
        %v895 = vmul.f32 %v605, %v894
        %v896 = vmul.f32 %v606, %v894
        %v897 = vadd.f32 %v891, %v895
        %v898 = vadd.f32 %v892, %v896
        %s899 = sld [smem:[#allocation8 + $0x183]]
        %v900 = vstv %s899
        %v901 = vmul.f32 %v657, %v900
        %v902 = vmul.f32 %v658, %v900
        %v903 = vadd.f32 %v897, %v901
        %v904 = vadd.f32 %v898, %v902
        %s905 = sld [smem:[#allocation8 + $0x184]]
        %v906 = vstv %s905
        %v907 = vmul.f32 %v709, %v906
        %v908 = vmul.f32 %v710, %v906
        %v909 = vadd.f32 %v903, %v907
        %v910 = vadd.f32 %v904, %v908
        %s911 = sld [smem:[#allocation8 + $0x185]]
        %v912 = vstv %s911
        %v913 = vmul.f32 %v761, %v912
        %v914 = vmul.f32 %v762, %v912
        %v915 = vadd.f32 %v909, %v913
        %v916 = vadd.f32 %v910, %v914
        %s917 = sld [smem:[#allocation9 + $0x3]]
        %v918 = vstv %s917
        %v919 = vadd.f32 %v915, %v918
        %v920 = vadd.f32 %v916, %v918
        %v921 = vtanh.pop %v919
        %v922 = vtanh.pop %v920
        %s923 = sld [smem:[#allocation11]]
        %v924 = vstv %s923
        %v925 = vmul.f32 %v801, %v924
        %v926 = vmul.f32 %v802, %v924
        %s927 = sld [smem:[#allocation11 + $0x1]]
        %v928 = vstv %s927
        %v929 = vmul.f32 %v841, %v928
        %v930 = vmul.f32 %v842, %v928
        %v931 = vadd.f32 %v925, %v929
        %v932 = vadd.f32 %v926, %v930
        %s933 = sld [smem:[#allocation11 + $0x2]]
        %v934 = vstv %s933
        %v935 = vmul.f32 %v881, %v934
        %v936 = vmul.f32 %v882, %v934
        %v937 = vadd.f32 %v931, %v935
        %v938 = vadd.f32 %v932, %v936
        %s939 = sld [smem:[#allocation11 + $0x3]]
        %v940 = vstv %s939
        %v941 = vmul.f32 %v921, %v940
        %v942 = vmul.f32 %v922, %v940
        %v943 = vadd.f32 %v937, %v941
        %v944 = vadd.f32 %v938, %v942
        %s945 = sld [smem:[#allocation2]]
        %v946 = vstv %s945
        %v947 = vadd.f32 %v943, %v946
        %v948 = vadd.f32 %v944, %v946
        %v949 = vtanh.pop %v947
        %v950 = vtanh.pop %v948
        %v951 = vmul.f32 %v949, 0.5
        %v952 = vmul.f32 %v950, 0.5
        %v953 = vadd.f32 %v951, 0.5
        %v954 = vadd.f32 %v952, 0.5
        %955 = vst [vmem:[%s426] sm:$0xff] %v953
        %956 = vst [vmem:[%s426 + $0x8] sm:$0xff] %v954
        %v957 = vld [vmem:[%s371 + $0x10] sm:$0xff]
        %v958 = vld [vmem:[%s371 + $0x18] sm:$0xff]
        %v959 = vld [vmem:[%s430 + $0x10] sm:$0xff]
        %v960 = vld [vmem:[%s430 + $0x18] sm:$0xff]
        %v961 = vld [vmem:[%s433 + $0x10] sm:$0xff]
        %v962 = vld [vmem:[%s433 + $0x18] sm:$0xff]
        %v963 = vld [vmem:[%s436 + $0x10] sm:$0xff]
        %v964 = vld [vmem:[%s436 + $0x18] sm:$0xff]
        %v965 = vld [vmem:[%s439 + $0x10] sm:$0xff]
        %v966 = vld [vmem:[%s439 + $0x18] sm:$0xff]
        %v967 = vld [vmem:[%s442 + $0x10] sm:$0xff]
        %v968 = vld [vmem:[%s442 + $0x18] sm:$0xff]
        %v969 = vld [vmem:[%s445 + $0x10] sm:$0xff]
        %v970 = vld [vmem:[%s445 + $0x18] sm:$0xff]
        %v971 = vld [vmem:[%s448 + $0x10] sm:$0xff]
        %v972 = vld [vmem:[%s448 + $0x18] sm:$0xff]
        %s973 = sld [smem:[#allocation4]]
        %v974 = vstv %s973
        %v975 = vmul.f32 %v957, %v974
        %v976 = vmul.f32 %v958, %v974
        %s977 = sld [smem:[#allocation4 + $0x1]]
        %v978 = vstv %s977
        %v979 = vmul.f32 %v959, %v978
        %v980 = vmul.f32 %v960, %v978
        %v981 = vadd.f32 %v975, %v979
        %v982 = vadd.f32 %v976, %v980
        %s983 = sld [smem:[#allocation4 + $0x2]]
        %v984 = vstv %s983
        %v985 = vmul.f32 %v961, %v984
        %v986 = vmul.f32 %v962, %v984
        %v987 = vadd.f32 %v981, %v985
        %v988 = vadd.f32 %v982, %v986
        %s989 = sld [smem:[#allocation4 + $0x3]]
        %v990 = vstv %s989
        %v991 = vmul.f32 %v963, %v990
        %v992 = vmul.f32 %v964, %v990
        %v993 = vadd.f32 %v987, %v991
        %v994 = vadd.f32 %v988, %v992
        %s995 = sld [smem:[#allocation4 + $0x4]]
        %v996 = vstv %s995
        %v997 = vmul.f32 %v965, %v996
        %v998 = vmul.f32 %v966, %v996
        %v999 = vadd.f32 %v993, %v997
        %v1000 = vadd.f32 %v994, %v998
        %s1001 = sld [smem:[#allocation4 + $0x5]]
        %v1002 = vstv %s1001
        %v1003 = vmul.f32 %v967, %v1002
        %v1004 = vmul.f32 %v968, %v1002
        %v1005 = vadd.f32 %v999, %v1003
        %v1006 = vadd.f32 %v1000, %v1004
        %s1007 = sld [smem:[#allocation4 + $0x6]]
        %v1008 = vstv %s1007
        %v1009 = vmul.f32 %v969, %v1008
        %v1010 = vmul.f32 %v970, %v1008
        %v1011 = vadd.f32 %v1005, %v1009
        %v1012 = vadd.f32 %v1006, %v1010
        %s1013 = sld [smem:[#allocation4 + $0x7]]
        %v1014 = vstv %s1013
        %v1015 = vmul.f32 %v971, %v1014
        %v1016 = vmul.f32 %v972, %v1014
        %v1017 = vadd.f32 %v1011, %v1015
        %v1018 = vadd.f32 %v1012, %v1016
        %s1019 = sld [smem:[#allocation6]]
        %v1020 = vstv %s1019
        %v1021 = vadd.f32 %v1017, %v1020
        %v1022 = vadd.f32 %v1018, %v1020
        %v1023 = vtanh.pop %v1021
        %v1024 = vtanh.pop %v1022
        %s1025 = sld [smem:[#allocation4 + $0x80]]
        %v1026 = vstv %s1025
        %v1027 = vmul.f32 %v957, %v1026
        %v1028 = vmul.f32 %v958, %v1026
        %s1029 = sld [smem:[#allocation4 + $0x81]]
        %v1030 = vstv %s1029
        %v1031 = vmul.f32 %v959, %v1030
        %v1032 = vmul.f32 %v960, %v1030
        %v1033 = vadd.f32 %v1027, %v1031
        %v1034 = vadd.f32 %v1028, %v1032
        %s1035 = sld [smem:[#allocation4 + $0x82]]
        %v1036 = vstv %s1035
        %v1037 = vmul.f32 %v961, %v1036
        %v1038 = vmul.f32 %v962, %v1036
        %v1039 = vadd.f32 %v1033, %v1037
        %v1040 = vadd.f32 %v1034, %v1038
        %s1041 = sld [smem:[#allocation4 + $0x83]]
        %v1042 = vstv %s1041
        %v1043 = vmul.f32 %v963, %v1042
        %v1044 = vmul.f32 %v964, %v1042
        %v1045 = vadd.f32 %v1039, %v1043
        %v1046 = vadd.f32 %v1040, %v1044
        %s1047 = sld [smem:[#allocation4 + $0x84]]
        %v1048 = vstv %s1047
        %v1049 = vmul.f32 %v965, %v1048
        %v1050 = vmul.f32 %v966, %v1048
        %v1051 = vadd.f32 %v1045, %v1049
        %v1052 = vadd.f32 %v1046, %v1050
        %s1053 = sld [smem:[#allocation4 + $0x85]]
        %v1054 = vstv %s1053
        %v1055 = vmul.f32 %v967, %v1054
        %v1056 = vmul.f32 %v968, %v1054
        %v1057 = vadd.f32 %v1051, %v1055
        %v1058 = vadd.f32 %v1052, %v1056
        %s1059 = sld [smem:[#allocation4 + $0x86]]
        %v1060 = vstv %s1059
        %v1061 = vmul.f32 %v969, %v1060
        %v1062 = vmul.f32 %v970, %v1060
        %v1063 = vadd.f32 %v1057, %v1061
        %v1064 = vadd.f32 %v1058, %v1062
        %s1065 = sld [smem:[#allocation4 + $0x87]]
        %v1066 = vstv %s1065
        %v1067 = vmul.f32 %v971, %v1066
        %v1068 = vmul.f32 %v972, %v1066
        %v1069 = vadd.f32 %v1063, %v1067
        %v1070 = vadd.f32 %v1064, %v1068
        %s1071 = sld [smem:[#allocation6 + $0x1]]
        %v1072 = vstv %s1071
        %v1073 = vadd.f32 %v1069, %v1072
        %v1074 = vadd.f32 %v1070, %v1072
        %v1075 = vtanh.pop %v1073
        %v1076 = vtanh.pop %v1074
        %s1077 = sld [smem:[#allocation4 + $0x100]]
        %v1078 = vstv %s1077
        %v1079 = vmul.f32 %v957, %v1078
        %v1080 = vmul.f32 %v958, %v1078
        %s1081 = sld [smem:[#allocation4 + $0x101]]
        %v1082 = vstv %s1081
        %v1083 = vmul.f32 %v959, %v1082
        %v1084 = vmul.f32 %v960, %v1082
        %v1085 = vadd.f32 %v1079, %v1083
        %v1086 = vadd.f32 %v1080, %v1084
        %s1087 = sld [smem:[#allocation4 + $0x102]]
        %v1088 = vstv %s1087
        %v1089 = vmul.f32 %v961, %v1088
        %v1090 = vmul.f32 %v962, %v1088
        %v1091 = vadd.f32 %v1085, %v1089
        %v1092 = vadd.f32 %v1086, %v1090
        %s1093 = sld [smem:[#allocation4 + $0x103]]
        %v1094 = vstv %s1093
        %v1095 = vmul.f32 %v963, %v1094
        %v1096 = vmul.f32 %v964, %v1094
        %v1097 = vadd.f32 %v1091, %v1095
        %v1098 = vadd.f32 %v1092, %v1096
        %s1099 = sld [smem:[#allocation4 + $0x104]]
        %v1100 = vstv %s1099
        %v1101 = vmul.f32 %v965, %v1100
        %v1102 = vmul.f32 %v966, %v1100
        %v1103 = vadd.f32 %v1097, %v1101
        %v1104 = vadd.f32 %v1098, %v1102
        %s1105 = sld [smem:[#allocation4 + $0x105]]
        %v1106 = vstv %s1105
        %v1107 = vmul.f32 %v967, %v1106
        %v1108 = vmul.f32 %v968, %v1106
        %v1109 = vadd.f32 %v1103, %v1107
        %v1110 = vadd.f32 %v1104, %v1108
        %s1111 = sld [smem:[#allocation4 + $0x106]]
        %v1112 = vstv %s1111
        %v1113 = vmul.f32 %v969, %v1112
        %v1114 = vmul.f32 %v970, %v1112
        %v1115 = vadd.f32 %v1109, %v1113
        %v1116 = vadd.f32 %v1110, %v1114
        %s1117 = sld [smem:[#allocation4 + $0x107]]
        %v1118 = vstv %s1117
        %v1119 = vmul.f32 %v971, %v1118
        %v1120 = vmul.f32 %v972, %v1118
        %v1121 = vadd.f32 %v1115, %v1119
        %v1122 = vadd.f32 %v1116, %v1120
        %s1123 = sld [smem:[#allocation6 + $0x2]]
        %v1124 = vstv %s1123
        %v1125 = vadd.f32 %v1121, %v1124
        %v1126 = vadd.f32 %v1122, %v1124
        %v1127 = vtanh.pop %v1125
        %v1128 = vtanh.pop %v1126
        %s1129 = sld [smem:[#allocation4 + $0x180]]
        %v1130 = vstv %s1129
        %v1131 = vmul.f32 %v957, %v1130
        %v1132 = vmul.f32 %v958, %v1130
        %s1133 = sld [smem:[#allocation4 + $0x181]]
        %v1134 = vstv %s1133
        %v1135 = vmul.f32 %v959, %v1134
        %v1136 = vmul.f32 %v960, %v1134
        %v1137 = vadd.f32 %v1131, %v1135
        %v1138 = vadd.f32 %v1132, %v1136
        %s1139 = sld [smem:[#allocation4 + $0x182]]
        %v1140 = vstv %s1139
        %v1141 = vmul.f32 %v961, %v1140
        %v1142 = vmul.f32 %v962, %v1140
        %v1143 = vadd.f32 %v1137, %v1141
        %v1144 = vadd.f32 %v1138, %v1142
        %s1145 = sld [smem:[#allocation4 + $0x183]]
        %v1146 = vstv %s1145
        %v1147 = vmul.f32 %v963, %v1146
        %v1148 = vmul.f32 %v964, %v1146
        %v1149 = vadd.f32 %v1143, %v1147
        %v1150 = vadd.f32 %v1144, %v1148
        %s1151 = sld [smem:[#allocation4 + $0x184]]
        %v1152 = vstv %s1151
        %v1153 = vmul.f32 %v965, %v1152
        %v1154 = vmul.f32 %v966, %v1152
        %v1155 = vadd.f32 %v1149, %v1153
        %v1156 = vadd.f32 %v1150, %v1154
        %s1157 = sld [smem:[#allocation4 + $0x185]]
        %v1158 = vstv %s1157
        %v1159 = vmul.f32 %v967, %v1158
        %v1160 = vmul.f32 %v968, %v1158
        %v1161 = vadd.f32 %v1155, %v1159
        %v1162 = vadd.f32 %v1156, %v1160
        %s1163 = sld [smem:[#allocation4 + $0x186]]
        %v1164 = vstv %s1163
        %v1165 = vmul.f32 %v969, %v1164
        %v1166 = vmul.f32 %v970, %v1164
        %v1167 = vadd.f32 %v1161, %v1165
        %v1168 = vadd.f32 %v1162, %v1166
        %s1169 = sld [smem:[#allocation4 + $0x187]]
        %v1170 = vstv %s1169
        %v1171 = vmul.f32 %v971, %v1170
        %v1172 = vmul.f32 %v972, %v1170
        %v1173 = vadd.f32 %v1167, %v1171
        %v1174 = vadd.f32 %v1168, %v1172
        %s1175 = sld [smem:[#allocation6 + $0x3]]
        %v1176 = vstv %s1175
        %v1177 = vadd.f32 %v1173, %v1176
        %v1178 = vadd.f32 %v1174, %v1176
        %v1179 = vtanh.pop %v1177
        %v1180 = vtanh.pop %v1178
        %s1181 = sld [smem:[#allocation4 + $0x200]]
        %v1182 = vstv %s1181
        %v1183 = vmul.f32 %v957, %v1182
        %v1184 = vmul.f32 %v958, %v1182
        %s1185 = sld [smem:[#allocation4 + $0x201]]
        %v1186 = vstv %s1185
        %v1187 = vmul.f32 %v959, %v1186
        %v1188 = vmul.f32 %v960, %v1186
        %v1189 = vadd.f32 %v1183, %v1187
        %v1190 = vadd.f32 %v1184, %v1188
        %s1191 = sld [smem:[#allocation4 + $0x202]]
        %v1192 = vstv %s1191
        %v1193 = vmul.f32 %v961, %v1192
        %v1194 = vmul.f32 %v962, %v1192
        %v1195 = vadd.f32 %v1189, %v1193
        %v1196 = vadd.f32 %v1190, %v1194
        %s1197 = sld [smem:[#allocation4 + $0x203]]
        %v1198 = vstv %s1197
        %v1199 = vmul.f32 %v963, %v1198
        %v1200 = vmul.f32 %v964, %v1198
        %v1201 = vadd.f32 %v1195, %v1199
        %v1202 = vadd.f32 %v1196, %v1200
        %s1203 = sld [smem:[#allocation4 + $0x204]]
        %v1204 = vstv %s1203
        %v1205 = vmul.f32 %v965, %v1204
        %v1206 = vmul.f32 %v966, %v1204
        %v1207 = vadd.f32 %v1201, %v1205
        %v1208 = vadd.f32 %v1202, %v1206
        %s1209 = sld [smem:[#allocation4 + $0x205]]
        %v1210 = vstv %s1209
        %v1211 = vmul.f32 %v967, %v1210
        %v1212 = vmul.f32 %v968, %v1210
        %v1213 = vadd.f32 %v1207, %v1211
        %v1214 = vadd.f32 %v1208, %v1212
        %s1215 = sld [smem:[#allocation4 + $0x206]]
        %v1216 = vstv %s1215
        %v1217 = vmul.f32 %v969, %v1216
        %v1218 = vmul.f32 %v970, %v1216
        %v1219 = vadd.f32 %v1213, %v1217
        %v1220 = vadd.f32 %v1214, %v1218
        %s1221 = sld [smem:[#allocation4 + $0x207]]
        %v1222 = vstv %s1221
        %v1223 = vmul.f32 %v971, %v1222
        %v1224 = vmul.f32 %v972, %v1222
        %v1225 = vadd.f32 %v1219, %v1223
        %v1226 = vadd.f32 %v1220, %v1224
        %s1227 = sld [smem:[#allocation6 + $0x4]]
        %v1228 = vstv %s1227
        %v1229 = vadd.f32 %v1225, %v1228
        %v1230 = vadd.f32 %v1226, %v1228
        %v1231 = vtanh.pop %v1229
        %v1232 = vtanh.pop %v1230
        %s1233 = sld [smem:[#allocation4 + $0x280]]
        %v1234 = vstv %s1233
        %v1235 = vmul.f32 %v957, %v1234
        %v1236 = vmul.f32 %v958, %v1234
        %s1237 = sld [smem:[#allocation4 + $0x281]]
        %v1238 = vstv %s1237
        %v1239 = vmul.f32 %v959, %v1238
        %v1240 = vmul.f32 %v960, %v1238
        %v1241 = vadd.f32 %v1235, %v1239
        %v1242 = vadd.f32 %v1236, %v1240
        %s1243 = sld [smem:[#allocation4 + $0x282]]
        %v1244 = vstv %s1243
        %v1245 = vmul.f32 %v961, %v1244
        %v1246 = vmul.f32 %v962, %v1244
        %v1247 = vadd.f32 %v1241, %v1245
        %v1248 = vadd.f32 %v1242, %v1246
        %s1249 = sld [smem:[#allocation4 + $0x283]]
        %v1250 = vstv %s1249
        %v1251 = vmul.f32 %v963, %v1250
        %v1252 = vmul.f32 %v964, %v1250
        %v1253 = vadd.f32 %v1247, %v1251
        %v1254 = vadd.f32 %v1248, %v1252
        %s1255 = sld [smem:[#allocation4 + $0x284]]
        %v1256 = vstv %s1255
        %v1257 = vmul.f32 %v965, %v1256
        %v1258 = vmul.f32 %v966, %v1256
        %v1259 = vadd.f32 %v1253, %v1257
        %v1260 = vadd.f32 %v1254, %v1258
        %s1261 = sld [smem:[#allocation4 + $0x285]]
        %v1262 = vstv %s1261
        %v1263 = vmul.f32 %v967, %v1262
        %v1264 = vmul.f32 %v968, %v1262
        %v1265 = vadd.f32 %v1259, %v1263
        %v1266 = vadd.f32 %v1260, %v1264
        %s1267 = sld [smem:[#allocation4 + $0x286]]
        %v1268 = vstv %s1267
        %v1269 = vmul.f32 %v969, %v1268
        %v1270 = vmul.f32 %v970, %v1268
        %v1271 = vadd.f32 %v1265, %v1269
        %v1272 = vadd.f32 %v1266, %v1270
        %s1273 = sld [smem:[#allocation4 + $0x287]]
        %v1274 = vstv %s1273
        %v1275 = vmul.f32 %v971, %v1274
        %v1276 = vmul.f32 %v972, %v1274
        %v1277 = vadd.f32 %v1271, %v1275
        %v1278 = vadd.f32 %v1272, %v1276
        %s1279 = sld [smem:[#allocation6 + $0x5]]
        %v1280 = vstv %s1279
        %v1281 = vadd.f32 %v1277, %v1280
        %v1282 = vadd.f32 %v1278, %v1280
        %v1283 = vtanh.pop %v1281
        %v1284 = vtanh.pop %v1282
        %s1285 = sld [smem:[#allocation8]]
        %v1286 = vstv %s1285
        %v1287 = vmul.f32 %v1023, %v1286
        %v1288 = vmul.f32 %v1024, %v1286
        %s1289 = sld [smem:[#allocation8 + $0x1]]
        %v1290 = vstv %s1289
        %v1291 = vmul.f32 %v1075, %v1290
        %v1292 = vmul.f32 %v1076, %v1290
        %v1293 = vadd.f32 %v1287, %v1291
        %v1294 = vadd.f32 %v1288, %v1292
        %s1295 = sld [smem:[#allocation8 + $0x2]]
        %v1296 = vstv %s1295
        %v1297 = vmul.f32 %v1127, %v1296
        %v1298 = vmul.f32 %v1128, %v1296
        %v1299 = vadd.f32 %v1293, %v1297
        %v1300 = vadd.f32 %v1294, %v1298
        %s1301 = sld [smem:[#allocation8 + $0x3]]
        %v1302 = vstv %s1301
        %v1303 = vmul.f32 %v1179, %v1302
        %v1304 = vmul.f32 %v1180, %v1302
        %v1305 = vadd.f32 %v1299, %v1303
        %v1306 = vadd.f32 %v1300, %v1304
        %s1307 = sld [smem:[#allocation8 + $0x4]]
        %v1308 = vstv %s1307
        %v1309 = vmul.f32 %v1231, %v1308
        %v1310 = vmul.f32 %v1232, %v1308
        %v1311 = vadd.f32 %v1305, %v1309
        %v1312 = vadd.f32 %v1306, %v1310
        %s1313 = sld [smem:[#allocation8 + $0x5]]
        %v1314 = vstv %s1313
        %v1315 = vmul.f32 %v1283, %v1314
        %v1316 = vmul.f32 %v1284, %v1314
        %v1317 = vadd.f32 %v1311, %v1315
        %v1318 = vadd.f32 %v1312, %v1316
        %s1319 = sld [smem:[#allocation9]]
        %v1320 = vstv %s1319
        %v1321 = vadd.f32 %v1317, %v1320
        %v1322 = vadd.f32 %v1318, %v1320
        %v1323 = vtanh.pop %v1321
        %v1324 = vtanh.pop %v1322
        %s1325 = sld [smem:[#allocation8 + $0x80]]
        %v1326 = vstv %s1325
        %v1327 = vmul.f32 %v1023, %v1326
        %v1328 = vmul.f32 %v1024, %v1326
        %s1329 = sld [smem:[#allocation8 + $0x81]]
        %v1330 = vstv %s1329
        %v1331 = vmul.f32 %v1075, %v1330
        %v1332 = vmul.f32 %v1076, %v1330
        %v1333 = vadd.f32 %v1327, %v1331
        %v1334 = vadd.f32 %v1328, %v1332
        %s1335 = sld [smem:[#allocation8 + $0x82]]
        %v1336 = vstv %s1335
        %v1337 = vmul.f32 %v1127, %v1336
        %v1338 = vmul.f32 %v1128, %v1336
        %v1339 = vadd.f32 %v1333, %v1337
        %v1340 = vadd.f32 %v1334, %v1338
        %s1341 = sld [smem:[#allocation8 + $0x83]]
        %v1342 = vstv %s1341
        %v1343 = vmul.f32 %v1179, %v1342
        %v1344 = vmul.f32 %v1180, %v1342
        %v1345 = vadd.f32 %v1339, %v1343
        %v1346 = vadd.f32 %v1340, %v1344
        %s1347 = sld [smem:[#allocation8 + $0x84]]
        %v1348 = vstv %s1347
        %v1349 = vmul.f32 %v1231, %v1348
        %v1350 = vmul.f32 %v1232, %v1348
        %v1351 = vadd.f32 %v1345, %v1349
        %v1352 = vadd.f32 %v1346, %v1350
        %s1353 = sld [smem:[#allocation8 + $0x85]]
        %v1354 = vstv %s1353
        %v1355 = vmul.f32 %v1283, %v1354
        %v1356 = vmul.f32 %v1284, %v1354
        %v1357 = vadd.f32 %v1351, %v1355
        %v1358 = vadd.f32 %v1352, %v1356
        %s1359 = sld [smem:[#allocation9 + $0x1]]
        %v1360 = vstv %s1359
        %v1361 = vadd.f32 %v1357, %v1360
        %v1362 = vadd.f32 %v1358, %v1360
        %v1363 = vtanh.pop %v1361
        %v1364 = vtanh.pop %v1362
        %s1365 = sld [smem:[#allocation8 + $0x100]]
        %v1366 = vstv %s1365
        %v1367 = vmul.f32 %v1023, %v1366
        %v1368 = vmul.f32 %v1024, %v1366
        %s1369 = sld [smem:[#allocation8 + $0x101]]
        %v1370 = vstv %s1369
        %v1371 = vmul.f32 %v1075, %v1370
        %v1372 = vmul.f32 %v1076, %v1370
        %v1373 = vadd.f32 %v1367, %v1371
        %v1374 = vadd.f32 %v1368, %v1372
        %s1375 = sld [smem:[#allocation8 + $0x102]]
        %v1376 = vstv %s1375
        %v1377 = vmul.f32 %v1127, %v1376
        %v1378 = vmul.f32 %v1128, %v1376
        %v1379 = vadd.f32 %v1373, %v1377
        %v1380 = vadd.f32 %v1374, %v1378
        %s1381 = sld [smem:[#allocation8 + $0x103]]
        %v1382 = vstv %s1381
        %v1383 = vmul.f32 %v1179, %v1382
        %v1384 = vmul.f32 %v1180, %v1382
        %v1385 = vadd.f32 %v1379, %v1383
        %v1386 = vadd.f32 %v1380, %v1384
        %s1387 = sld [smem:[#allocation8 + $0x104]]
        %v1388 = vstv %s1387
        %v1389 = vmul.f32 %v1231, %v1388
        %v1390 = vmul.f32 %v1232, %v1388
        %v1391 = vadd.f32 %v1385, %v1389
        %v1392 = vadd.f32 %v1386, %v1390
        %s1393 = sld [smem:[#allocation8 + $0x105]]
        %v1394 = vstv %s1393
        %v1395 = vmul.f32 %v1283, %v1394
        %v1396 = vmul.f32 %v1284, %v1394
        %v1397 = vadd.f32 %v1391, %v1395
        %v1398 = vadd.f32 %v1392, %v1396
        %s1399 = sld [smem:[#allocation9 + $0x2]]
        %v1400 = vstv %s1399
        %v1401 = vadd.f32 %v1397, %v1400
        %v1402 = vadd.f32 %v1398, %v1400
        %v1403 = vtanh.pop %v1401
        %v1404 = vtanh.pop %v1402
        %s1405 = sld [smem:[#allocation8 + $0x180]]
        %v1406 = vstv %s1405
        %v1407 = vmul.f32 %v1023, %v1406
        %v1408 = vmul.f32 %v1024, %v1406
        %s1409 = sld [smem:[#allocation8 + $0x181]]
        %v1410 = vstv %s1409
        %v1411 = vmul.f32 %v1075, %v1410
        %v1412 = vmul.f32 %v1076, %v1410
        %v1413 = vadd.f32 %v1407, %v1411
        %v1414 = vadd.f32 %v1408, %v1412
        %s1415 = sld [smem:[#allocation8 + $0x182]]
        %v1416 = vstv %s1415
        %v1417 = vmul.f32 %v1127, %v1416
        %v1418 = vmul.f32 %v1128, %v1416
        %v1419 = vadd.f32 %v1413, %v1417
        %v1420 = vadd.f32 %v1414, %v1418
        %s1421 = sld [smem:[#allocation8 + $0x183]]
        %v1422 = vstv %s1421
        %v1423 = vmul.f32 %v1179, %v1422
        %v1424 = vmul.f32 %v1180, %v1422
        %v1425 = vadd.f32 %v1419, %v1423
        %v1426 = vadd.f32 %v1420, %v1424
        %s1427 = sld [smem:[#allocation8 + $0x184]]
        %v1428 = vstv %s1427
        %v1429 = vmul.f32 %v1231, %v1428
        %v1430 = vmul.f32 %v1232, %v1428
        %v1431 = vadd.f32 %v1425, %v1429
        %v1432 = vadd.f32 %v1426, %v1430
        %s1433 = sld [smem:[#allocation8 + $0x185]]
        %v1434 = vstv %s1433
        %v1435 = vmul.f32 %v1283, %v1434
        %v1436 = vmul.f32 %v1284, %v1434
        %v1437 = vadd.f32 %v1431, %v1435
        %v1438 = vadd.f32 %v1432, %v1436
        %s1439 = sld [smem:[#allocation9 + $0x3]]
        %v1440 = vstv %s1439
        %v1441 = vadd.f32 %v1437, %v1440
        %v1442 = vadd.f32 %v1438, %v1440
        %v1443 = vtanh.pop %v1441
        %v1444 = vtanh.pop %v1442
        %s1445 = sld [smem:[#allocation11]]
        %v1446 = vstv %s1445
        %v1447 = vmul.f32 %v1323, %v1446
        %v1448 = vmul.f32 %v1324, %v1446
        %s1449 = sld [smem:[#allocation11 + $0x1]]
        %v1450 = vstv %s1449
        %v1451 = vmul.f32 %v1363, %v1450
        %v1452 = vmul.f32 %v1364, %v1450
        %v1453 = vadd.f32 %v1447, %v1451
        %v1454 = vadd.f32 %v1448, %v1452
        %s1455 = sld [smem:[#allocation11 + $0x2]]
        %v1456 = vstv %s1455
        %v1457 = vmul.f32 %v1403, %v1456
        %v1458 = vmul.f32 %v1404, %v1456
        %v1459 = vadd.f32 %v1453, %v1457
        %v1460 = vadd.f32 %v1454, %v1458
        %s1461 = sld [smem:[#allocation11 + $0x3]]
        %v1462 = vstv %s1461
        %v1463 = vmul.f32 %v1443, %v1462
        %v1464 = vmul.f32 %v1444, %v1462
        %v1465 = vadd.f32 %v1459, %v1463
        %v1466 = vadd.f32 %v1460, %v1464
        %s1467 = sld [smem:[#allocation2]]
        %v1468 = vstv %s1467
        %v1469 = vadd.f32 %v1465, %v1468
        %v1470 = vadd.f32 %v1466, %v1468
        %v1471 = vtanh.pop %v1469
        %v1472 = vtanh.pop %v1470
        %v1473 = vmul.f32 %v1471, 0.5
        %v1474 = vmul.f32 %v1472, 0.5
        %v1475 = vadd.f32 %v1473, 0.5
        %v1476 = vadd.f32 %v1474, 0.5
        %1477 = vst [vmem:[%s426 + $0x10] sm:$0xff] %v1475
        %1478 = vst [vmem:[%s426 + $0x18] sm:$0xff] %v1476
        %s1479 = smul.u32 4, %s22
        %p1480 = scmp.lt.s32.totalorder %s1479, 7
        %s1481 = scalar_select %p1480, %s1479, 7
        %s1482 = smul.addr %s1481, 8
        %s1483 = scalar_lea.vmem %s7, %s1482
        // Predicated region
        $region92: #{mlp_forward.1} parent=66 // pred_check
          %p1484 = pneg %p192
        $region93: #{mlp_forward.1} parent=66 // pred_check_branch
          %1486 = sbr.rel (%p1484) target = $region95
        $region94: #{mlp_forward.1} parent=66 // pred_region
          %s1487 = smul.u32 4, %s22
        $region95: #{mlp_forward.1} parent=66 // pred_fallthru
          _
      $region67: #{mlp_forward.1} parent=5 // pred_fallthru
        _
      %p1488 = scmp.le.s32.totalorder 2, %s17
      // Predicated region
      $region96: #{mlp_forward.1} parent=5 // pred_check
        %p1489 = pneg %p1488
      $region97: #{mlp_forward.1} parent=5 // pred_check_branch
        %1491 = sbr.rel (%p1489) target = $region99
      $region98: #{mlp_forward.1} parent=5 // pred_region
        %s1492 = ssub.s32 %s17, 2
        // Predicated region
        $region100: #{mlp_forward.1} parent=98 // pred_check
          %p1493 = pneg %p198
        $region101: #{mlp_forward.1} parent=98 // pred_check_branch
          %1495 = sbr.rel (%p1493) target = $region103
        $region102: #{mlp_forward.1} parent=98 // pred_region
          %s1496 = smul.u32 4, %s23
          %p1497 = scmp.lt.s32.totalorder %s1496, 7
          %s1498 = scalar_select %p1497, %s1496, 7
          %s1499 = smul.addr %s1498, 8
          %s1500 = scalar_lea.vmem %s7, %s1499
        $region103: #{mlp_forward.1} parent=98 // pred_fallthru
          _
      $region99: #{mlp_forward.1} parent=5 // pred_fallthru
        _
    $region6: #{mlp_forward.1} parent=1 // loop_footer
      %s21 = sadd.s32 1, %s17
    $region7: #{mlp_forward.1} parent=1 // loop_footer_branch
      %16 = sbr.rel target = $region3
    $region8: #{mlp_forward.1} parent=1 // loop_exit
      _
    %1501 = vsyncpa [#allocation5], 1
    %s1502 = scalar_lea.sflag [#allocation5], 1
    %1503 = vsyncpa %s1502, 1
    %1504 = vsyncpa [#allocation7], 1
    %1505 = vsyncpa [#allocation10], 1

</llo_original>
